<compile_context>
chip_gen: v5e
topology: v5e:2x2
jax: 0.10.0
libtpu: 0.0.40
codegen_flags: <defaults>
</compile_context>

<pallas_src>
import functools

import jax
import jax.numpy as jnp
from jax import lax
from jax.experimental import pallas as pl
from jax.experimental.pallas import tpu as pltpu


def _dist_attn_kernel(k_ref, qT_ref, vT_ref, pos_i_ref, pos_jt_ref,
                      mask_i_ref, mask_j_ref,
                      w1_ref, b1_ref, w2_ref, b2_ref, o_ref,
                      *, dist_decay):
    TI = k_ref.shape[1]
    D = k_ref.shape[2]
    N = qT_ref.shape[2]
    P = pos_i_ref.shape[2]
    D4 = w1_ref.shape[0]
    cdt = k_ref.dtype                      # compute dtype (bf16 on v6e/v7x, f32 strict)

    xk = k_ref[0]                          # [TI, D]   rows i of this query tile
    xqT = qT_ref[0]                        # [D, N]    all j, pre-scaled by head_dim**-0.5
    xvT = vT_ref[0]                        # [D, N]    all j

    pos_i = pos_i_ref[0]                   # [TI, P] f32
    pos_jt = pos_jt_ref[0]                 # [P, N]  f32

    # --- pairwise squared distances, lane-dense [TI, N] (no [TI, N, P] temp) ---
    d2 = jnp.zeros((TI, N), jnp.float32)
    for p in range(P):                     # P is tiny and static (e.g. 3)
        diff = pos_i[:, p:p + 1] - pos_jt[p:p + 1, :]          # [TI,1] - [1,N]
        d2 = d2 + diff * diff
    dist = jnp.sqrt(d2).astype(cdt)                            # [TI, N] compute dtype

    # --- distance MLP, channels-in-sublanes / j-in-lanes layout ---
    # h[i, c, j] = relu(w1[c] * dist[i, j] + b1[c]); built directly in compute dtype.
    h = jnp.maximum(dist[:, None, :] * w1_ref[...][None, :, :]
                    + b1_ref[...][None, :, :], 0)              # [TI, D4, N] cdt
    # emb[i, d, j] = sum_c w2[c, d] * h[i, c, j]  — batched matmul (batch = i) so the
    # result lands in [TI, D, N] with j in lanes (no relayout of the big tensor).
    w2b = jnp.broadcast_to(w2_ref[...][None, :, :], (TI, D, D4))   # [TI, D, D4] cdt
    emb = lax.dot_general(w2b, h,
                          dimension_numbers=(((2,), (1,)), ((0,), (0,))),
                          preferred_element_type=jnp.float32)  # [TI, D, N] f32 accum

    # --- per-channel attention logits (scaling folded into xq, b2 folded into xk) ---
    xkb = xk + b2_ref[...]                                     # [TI, D] cdt
    w = (xkb[:, :, None] + emb.astype(cdt)) * xqT[None, :, :]  # [TI, D, N] cdt
    if dist_decay != 0:
        decay = jnp.exp(d2 * (-1.0 / dist_decay)).astype(cdt)  # [TI, N]
        w = decay[:, None, :] * w

    # --- mask fill where BOTH i and j are padded (matches the module's pair mask;
    #     finite -1e30 fill instead of -inf so fully-masked rows stay finite) ---
    pair = mask_i_ref[0] * mask_j_ref[0]                       # [TI, N] f32
    w = jnp.where((pair > 0.0)[:, None, :], jnp.asarray(-1e30, w.dtype), w)

    # --- per-channel softmax over j (lanes); f32 accumulation, deferred normalization ---
    m = jnp.max(w, axis=-1, keepdims=True)                     # [TI, D, 1]
    e = jnp.exp(w - m)                                         # [TI, D, N] cdt
    s = jnp.sum(e.astype(jnp.float32), axis=-1)                # [TI, D] f32
    num = jnp.sum((xvT[None, :, :] * e).astype(jnp.float32), axis=-1)   # [TI, D] f32
    out = num / s                                              # exact divide ([TI, D] only)
    o_ref[0] = out.astype(o_ref.dtype)


def _pick_tile(N, D, D4, P, cbytes, out_bytes=4):
    """Choose the query-tile size TI and an explicit VMEM limit, chip-aware."""
    def est(ti):
        per = ti * N * (D4 * cbytes            # h slab (dominant)
                        + D * 4                # emb (f32 accumulation)
                        + 2 * D * cbytes       # w / e live copies
                        + 4 * 4)               # d2, dist, decay, pair
        per += ti * D * D4 * cbytes            # broadcast w2^T for the batched matmul
        per += 2 * (ti * D * cbytes            # k block (double-buffered)
                    + 2 * D * N * cbytes       # qT, vT blocks
                    + ti * P * 4 + P * N * 4 + (ti + N) * 4)
        per += 2 * (2 * D4 + D * D4 + D) * cbytes   # weights
        per += 2 * ti * D * out_bytes          # output block
        return per

    try:
        cap = int(getattr(pltpu.get_tpu_info(), "vmem_capacity_bytes", 64 << 20))
    except Exception:  # pragma: no cover - conservative fallback (sized for v7x)
        cap = 64 << 20
    budget = max(16 << 20, int(cap * 0.42))    # ~27 MiB on v7x, ~54 MiB on v5e/v6e

    if N % 8 != 0 or N <= 8:
        ti = N                                 # full rows: block == array dims
    else:
        ti = N
        while ti > 8 and (est(ti) > budget or N % ti != 0):
            ti -= 8
        ti = max(ti, 8)

    e = est(ti)
    vmem_limit = None
    if e > (12 << 20):                         # above the smallest default scoped limit
        vmem_limit = min(max(int(e * 1.5), 32 << 20), int(cap * 0.70))
    return ti, vmem_limit


def multihead_distance_self_attention(x, pos, mask, params, *, num_heads, dist_decay,
                                      compute_dtype=jnp.bfloat16):
    """compute_dtype: dtype for the dist-MLP build/matmul operands and the softmax-path
    elementwise work (bf16 recommended on v6e/v7x; use float32 on v5e / for strict checks).
    Matmul and j-axis accumulations are always f32."""
    B, N, D = x.shape
    P = pos.shape[-1]
    head_dim = D // num_heads
    assert head_dim * num_heads == D
    scaling = head_dim ** -0.5
    D4 = params["w2"].shape[0]
    cdt = jnp.dtype(compute_dtype)

    # Hoisted projections: one GEMM over B*N rows; q pre-scaled (saves an N^2*D multiply).
    qkv = x.reshape(B * N, D) @ params["wqkv"] + params["bqkv"][0]
    xq, xk, xv = jnp.split(qkv, 3, axis=-1)
    k = xk.reshape(B, N, D).astype(cdt)                               # [B, N, D]
    qT = jnp.swapaxes((xq * scaling).reshape(B, N, D), 1, 2).astype(cdt)   # [B, D, N]
    vT = jnp.swapaxes(xv.reshape(B, N, D), 1, 2).astype(cdt)               # [B, D, N]

    pos_f = pos.astype(jnp.float32)
    pos_t = jnp.swapaxes(pos_f, 1, 2)                                 # [B, P, N]
    mask_f = mask.astype(jnp.float32)
    mask_i = mask_f[:, :, None]                                       # [B, N, 1]
    mask_j = mask_f[:, None, :]                                       # [B, 1, N]

    w1c = params["w1"].reshape(D4, 1).astype(cdt)                     # [D4, 1]
    b1c = params["b1"].reshape(D4, 1).astype(cdt)                     # [D4, 1]
    w2T = params["w2"].T.astype(cdt)                                  # [D, D4]
    b2 = params["b2"].astype(cdt)                                     # [1, D]

    TI, vmem_limit = _pick_tile(N, D, D4, P, cdt.itemsize,
                                out_bytes=jnp.dtype(x.dtype).itemsize)
    NI = N // TI

    kernel = functools.partial(_dist_attn_kernel, dist_decay=dist_decay)

    grid_spec = pltpu.PrefetchScalarGridSpec(
        num_scalar_prefetch=0,
        grid=(B, NI),
        in_specs=[
            pl.BlockSpec((1, TI, D), lambda b, i: (b, i, 0)),   # k   (query-tile rows)
            pl.BlockSpec((1, D, N), lambda b, i: (b, 0, 0)),    # q^T (all j, pre-scaled)
            pl.BlockSpec((1, D, N), lambda b, i: (b, 0, 0)),    # v^T (all j)
            pl.BlockSpec((1, TI, P), lambda b, i: (b, i, 0)),   # pos rows of the tile
            pl.BlockSpec((1, P, N), lambda b, i: (b, 0, 0)),    # pos^T (all j)
            pl.BlockSpec((1, TI, 1), lambda b, i: (b, i, 0)),   # mask_i
            pl.BlockSpec((1, 1, N), lambda b, i: (b, 0, 0)),    # mask_j
            pl.BlockSpec((D4, 1), lambda b, i: (0, 0)),         # dist_mlp[0].weight (col)
            pl.BlockSpec((D4, 1), lambda b, i: (0, 0)),         # dist_mlp[0].bias   (col)
            pl.BlockSpec((D, D4), lambda b, i: (0, 0)),         # dist_mlp[2].weight^T
            pl.BlockSpec((1, D), lambda b, i: (0, 0)),          # dist_mlp[2].bias
        ],
        out_specs=pl.BlockSpec((1, TI, D), lambda b, i: (b, i, 0)),
    )

    cp_kwargs = dict(dimension_semantics=("parallel", "parallel"))
    if vmem_limit is not None:
        cp_kwargs["vmem_limit_bytes"] = vmem_limit

    attn = pl.pallas_call(
        kernel,
        out_shape=jax.ShapeDtypeStruct((B, N, D), x.dtype),
        grid_spec=grid_spec,
        compiler_params=pltpu.CompilerParams(**cp_kwargs),
    )(k, qT, vT, pos_f, pos_t, mask_i, mask_j, w1c, b1c, w2T, b2)

    out = attn.reshape(B * N, D) @ params["wout"] + params["bout"][0]
    return out.reshape(B, N, D).astype(x.dtype)


def reference_forward(x, pos, mask, params, *, num_heads, dist_decay):
    """Pure-JAX mirror of the PyTorch forward for verification."""
    B, N, D = x.shape
    head_dim = D // num_heads
    scaling = head_dim ** -0.5
    qkv = x @ params["wqkv"] + params["bqkv"][0]
    xq, xk, xv = jnp.split(qkv, 3, axis=-1)
    diff = pos[:, :, None, :] - pos[:, None, :, :]
    dist = jnp.sqrt(jnp.sum(diff * diff, axis=-1, keepdims=True))        # [B,N,N,1]
    h = jax.nn.relu(dist * params["w1"][0] + params["b1"][0])            # [B,N,N,4D]
    emb = h @ params["w2"] + params["b2"][0]                             # [B,N,N,D]
    w = jnp.exp(-(dist * dist) / dist_decay) if dist_decay != 0 else 1.0
    w = w * ((xk[:, :, None, :] + emb) * xq[:, None, :, :] * scaling)
    pair = (mask[:, :, None] * mask[:, None, :]) > 0
    w = jnp.where(pair[:, :, :, None], -jnp.inf, w)
    w = jax.nn.softmax(w, axis=2)
    out = jnp.sum(xv[:, None, :, :] * w, axis=2)
    return out @ params["wout"] + params["bout"][0]


if __name__ == "__main__":
    B, N, D, H, P = 2, 8, 32, 4, 3          # batch, points, embed_dim, heads, pos-dims
    dist_decay = 1.0                        # args.dist_decay != 0  -> exp decay path
    # args.dist_embedding = True            -> dist_mlp path enabled

    key = jax.random.PRNGKey(0)
    ks = jax.random.split(key, 10)

    def init(k, shape, scale=0.1):
        return (scale * jax.random.normal(k, shape)).astype(jnp.float32)

    # weights stored pre-transposed (in_features, out_features) so forward does x @ W + b
    params = {
        "wqkv": init(ks[0], (D, 3 * D)),
        "bqkv": init(ks[1], (1, 3 * D)),
        "w1":   init(ks[2], (1, 4 * D)),
        "b1":   init(ks[3], (1, 4 * D)),
        "w2":   init(ks[4], (4 * D, D)),
        "b2":   init(ks[5], (1, D)),
        "wout": init(ks[6], (D, D)),
        "bout": init(ks[7], (1, D)),
    }

    x = jax.random.normal(ks[8], (B, N, D), dtype=jnp.float32)
    pos = jax.random.normal(ks[9], (B, N, P), dtype=jnp.float32)
    # padding mask (1.0 = masked), like the PyTorch bool mask; no fully-masked row
    mask = jnp.zeros((B, N), dtype=jnp.float32).at[0, -2:].set(1.0)

    ref = reference_forward(x, pos, mask, params, num_heads=H, dist_decay=dist_decay)

    # strict f32 compute path (v5e-safe; also the tight-tolerance check)
    out_f32 = multihead_distance_self_attention(
        x, pos, mask, params, num_heads=H, dist_decay=dist_decay,
        compute_dtype=jnp.float32)
    out_f32 = jax.block_until_ready(out_f32)
    assert out_f32.shape == (B, N, D)
    err32 = float(jnp.max(jnp.abs(out_f32 - ref)))
    assert err32 < 5e-3, f"f32 path max abs err {err32}"

    # bf16 compute path (v6e/v7x recommendation; f32 matmul + reduction accumulation)
    out_bf16 = multihead_distance_self_attention(
        x, pos, mask, params, num_heads=H, dist_decay=dist_decay,
        compute_dtype=jnp.bfloat16)
    out_bf16 = jax.block_until_ready(out_bf16)
    errbf = float(jnp.max(jnp.abs(out_bf16 - ref)))
    assert errbf < 5e-2, f"bf16 path max abs err {errbf}"

    print("KERNEL_OK")
</pallas_src>

<mosaic_0001>
module attributes {stable_mosaic.version = 11 : i64} {
  func.func @_dist_attn_kernel(%arg0: i32, %arg1: i32, %arg2: memref<1x8x32xf32, #tpu.memory_space<vmem>>, %arg3: memref<1x32x8xf32, #tpu.memory_space<vmem>>, %arg4: memref<1x32x8xf32, #tpu.memory_space<vmem>>, %arg5: memref<1x8x3xf32, #tpu.memory_space<vmem>>, %arg6: memref<1x3x8xf32, #tpu.memory_space<vmem>>, %arg7: memref<1x8x1xf32, #tpu.memory_space<vmem>>, %arg8: memref<1x1x8xf32, #tpu.memory_space<vmem>>, %arg9: memref<128x1xf32, #tpu.memory_space<vmem>>, %arg10: memref<128x1xf32, #tpu.memory_space<vmem>>, %arg11: memref<32x128xf32, #tpu.memory_space<vmem>>, %arg12: memref<1x32xf32, #tpu.memory_space<vmem>>, %arg13: memref<1x8x32xf32, #tpu.memory_space<vmem>>) attributes {dimension_semantics = [#tpu.dimension_semantics<parallel>, #tpu.dimension_semantics<parallel>], iteration_bounds = array<i64: 2, 1>, scalar_prefetch = 0 : i64, scratch_operands = 0 : i64, tpu.core_type = #tpu.core_type<tc>, window_params = [{transform_indices = @transform_0, window_bounds = array<i64: 1, 8, 32>}, {transform_indices = @transform_1, window_bounds = array<i64: 1, 32, 8>}, {transform_indices = @transform_2, window_bounds = array<i64: 1, 32, 8>}, {transform_indices = @transform_3, window_bounds = array<i64: 1, 8, 3>}, {transform_indices = @transform_4, window_bounds = array<i64: 1, 3, 8>}, {transform_indices = @transform_5, window_bounds = array<i64: 1, 8, 1>}, {transform_indices = @transform_6, window_bounds = array<i64: 1, 1, 8>}, {pipeline_mode = #tpu.pipeline_mode<synchronous>, transform_indices = @transform_7, window_bounds = array<i64: 128, 1>}, {pipeline_mode = #tpu.pipeline_mode<synchronous>, transform_indices = @transform_8, window_bounds = array<i64: 128, 1>}, {pipeline_mode = #tpu.pipeline_mode<synchronous>, transform_indices = @transform_9, window_bounds = array<i64: 32, 128>}, {pipeline_mode = #tpu.pipeline_mode<synchronous>, transform_indices = @transform_10, window_bounds = array<i64: 1, 32>}, {transform_indices = @transform_11, window_bounds = array<i64: 1, 8, 32>}]} {
    %c0 = arith.constant 0 : index
    %c0_0 = arith.constant 0 : index
    %c0_1 = arith.constant 0 : index
    %0 = vector.load %arg2[%c0, %c0_0, %c0_1] : memref<1x8x32xf32, #tpu.memory_space<vmem>>, vector<1x8x32xf32>
    %1 = vector.shape_cast %0 : vector<1x8x32xf32> to vector<8x32xf32>
    %c0_2 = arith.constant 0 : index
    %c0_3 = arith.constant 0 : index
    %c0_4 = arith.constant 0 : index
    %2 = vector.load %arg3[%c0_2, %c0_3, %c0_4] : memref<1x32x8xf32, #tpu.memory_space<vmem>>, vector<1x32x8xf32>
    %3 = vector.shape_cast %2 : vector<1x32x8xf32> to vector<32x8xf32>
    %c0_5 = arith.constant 0 : index
    %c0_6 = arith.constant 0 : index
    %c0_7 = arith.constant 0 : index
    %4 = vector.load %arg4[%c0_5, %c0_6, %c0_7] : memref<1x32x8xf32, #tpu.memory_space<vmem>>, vector<1x32x8xf32>
    %5 = vector.shape_cast %4 : vector<1x32x8xf32> to vector<32x8xf32>
    %c0_8 = arith.constant 0 : index
    %c0_9 = arith.constant 0 : index
    %c0_10 = arith.constant 0 : index
    %6 = vector.load %arg5[%c0_8, %c0_9, %c0_10] : memref<1x8x3xf32, #tpu.memory_space<vmem>>, vector<1x8x3xf32>
    %7 = vector.shape_cast %6 : vector<1x8x3xf32> to vector<8x3xf32>
    %c0_11 = arith.constant 0 : index
    %c0_12 = arith.constant 0 : index
    %c0_13 = arith.constant 0 : index
    %8 = vector.load %arg6[%c0_11, %c0_12, %c0_13] : memref<1x3x8xf32, #tpu.memory_space<vmem>>, vector<1x3x8xf32>
    %9 = vector.shape_cast %8 : vector<1x3x8xf32> to vector<3x8xf32>
    %cst = arith.constant 0.000000e+00 : f32
    %10 = vector.broadcast %cst : f32 to vector<8x8xf32>
    %11 = vector.extract_strided_slice %7 {offsets = [0, 0], sizes = [8, 1], strides = [1, 1]} : vector<8x3xf32> to vector<8x1xf32>
    %12 = vector.extract_strided_slice %9 {offsets = [0, 0], sizes = [1, 8], strides = [1, 1]} : vector<3x8xf32> to vector<1x8xf32>
    %13 = vector.broadcast %11 : vector<8x1xf32> to vector<8x8xf32>
    %14 = vector.broadcast %12 : vector<1x8xf32> to vector<8x8xf32>
    %15 = arith.subf %13, %14 : vector<8x8xf32>
    %16 = arith.mulf %15, %15 : vector<8x8xf32>
    %17 = arith.addf %10, %16 : vector<8x8xf32>
    %18 = vector.extract_strided_slice %7 {offsets = [0, 1], sizes = [8, 1], strides = [1, 1]} : vector<8x3xf32> to vector<8x1xf32>
    %19 = vector.extract_strided_slice %9 {offsets = [1, 0], sizes = [1, 8], strides = [1, 1]} : vector<3x8xf32> to vector<1x8xf32>
    %20 = vector.broadcast %18 : vector<8x1xf32> to vector<8x8xf32>
    %21 = vector.broadcast %19 : vector<1x8xf32> to vector<8x8xf32>
    %22 = arith.subf %20, %21 : vector<8x8xf32>
    %23 = arith.mulf %22, %22 : vector<8x8xf32>
    %24 = arith.addf %17, %23 : vector<8x8xf32>
    %25 = vector.extract_strided_slice %7 {offsets = [0, 2], sizes = [8, 1], strides = [1, 1]} : vector<8x3xf32> to vector<8x1xf32>
    %26 = vector.extract_strided_slice %9 {offsets = [2, 0], sizes = [1, 8], strides = [1, 1]} : vector<3x8xf32> to vector<1x8xf32>
    %27 = vector.broadcast %25 : vector<8x1xf32> to vector<8x8xf32>
    %28 = vector.broadcast %26 : vector<1x8xf32> to vector<8x8xf32>
    %29 = arith.subf %27, %28 : vector<8x8xf32>
    %30 = arith.mulf %29, %29 : vector<8x8xf32>
    %31 = arith.addf %24, %30 : vector<8x8xf32>
    %32 = math.sqrt %31 : vector<8x8xf32>
    %33 = vector.shape_cast %32 : vector<8x8xf32> to vector<8x1x8xf32>
    %c0_14 = arith.constant 0 : index
    %c0_15 = arith.constant 0 : index
    %34 = vector.load %arg9[%c0_14, %c0_15] : memref<128x1xf32, #tpu.memory_space<vmem>>, vector<128x1xf32>
    %35 = vector.shape_cast %34 : vector<128x1xf32> to vector<1x128x1xf32>
    %36 = vector.broadcast %33 : vector<8x1x8xf32> to vector<8x128x8xf32>
    %37 = vector.broadcast %35 : vector<1x128x1xf32> to vector<8x128x8xf32>
    %38 = arith.mulf %36, %37 : vector<8x128x8xf32>
    %c0_16 = arith.constant 0 : index
    %c0_17 = arith.constant 0 : index
    %39 = vector.load %arg10[%c0_16, %c0_17] : memref<128x1xf32, #tpu.memory_space<vmem>>, vector<128x1xf32>
    %40 = vector.shape_cast %39 : vector<128x1xf32> to vector<1x128x1xf32>
    %41 = vector.broadcast %40 : vector<1x128x1xf32> to vector<8x128x8xf32>
    %42 = arith.addf %38, %41 : vector<8x128x8xf32>
    %cst_18 = arith.constant 0.000000e+00 : f32
    %43 = vector.broadcast %cst_18 : f32 to vector<8x128x8xf32>
    %44 = arith.maximumf %42, %43 : vector<8x128x8xf32>
    %c0_19 = arith.constant 0 : index
    %c0_20 = arith.constant 0 : index
    %45 = vector.load %arg11[%c0_19, %c0_20] : memref<32x128xf32, #tpu.memory_space<vmem>>, vector<32x128xf32>
    %46 = vector.shape_cast %45 : vector<32x128xf32> to vector<1x32x128xf32>
    %47 = vector.shape_cast %46 : vector<1x32x128xf32> to vector<1x32x128xf32>
    %48 = vector.broadcast %47 : vector<1x32x128xf32> to vector<8x32x128xf32>
    %cst_21 = arith.constant dense<0.000000e+00> : vector<8x32x8xf32>
    %49 = tpu.matmul %48, %44, %cst_21 {dimension_numbers = #tpu.dot_dimension_numbers<[2], [1], [1], [2], [0, 0, 0, 1, 1, 2], [0], [0]>} : vector<8x32x128xf32>, vector<8x128x8xf32>, vector<8x32x8xf32> -> vector<8x32x8xf32>
    %c0_22 = arith.constant 0 : index
    %c0_23 = arith.constant 0 : index
    %50 = vector.load %arg12[%c0_22, %c0_23] : memref<1x32xf32, #tpu.memory_space<vmem>>, vector<1x32xf32>
    %51 = vector.broadcast %50 : vector<1x32xf32> to vector<8x32xf32>
    %52 = arith.addf %1, %51 : vector<8x32xf32>
    %53 = vector.shape_cast %52 : vector<8x32xf32> to vector<8x32x1xf32>
    %54 = vector.broadcast %53 : vector<8x32x1xf32> to vector<8x32x8xf32>
    %55 = arith.addf %54, %49 : vector<8x32x8xf32>
    %56 = vector.shape_cast %3 : vector<32x8xf32> to vector<1x32x8xf32>
    %57 = vector.broadcast %56 : vector<1x32x8xf32> to vector<8x32x8xf32>
    %58 = arith.mulf %55, %57 : vector<8x32x8xf32>
    %cst_24 = arith.constant -1.000000e+00 : f32
    %59 = vector.broadcast %cst_24 : f32 to vector<8x8xf32>
    %60 = arith.mulf %31, %59 : vector<8x8xf32>
    %61 = math.exp %60 : vector<8x8xf32>
    %62 = vector.shape_cast %61 : vector<8x8xf32> to vector<8x1x8xf32>
    %63 = vector.broadcast %62 : vector<8x1x8xf32> to vector<8x32x8xf32>
    %64 = arith.mulf %63, %58 : vector<8x32x8xf32>
    %c0_25 = arith.constant 0 : index
    %c0_26 = arith.constant 0 : index
    %c0_27 = arith.constant 0 : index
    %65 = vector.load %arg7[%c0_25, %c0_26, %c0_27] : memref<1x8x1xf32, #tpu.memory_space<vmem>>, vector<1x8x1xf32>
    %66 = vector.shape_cast %65 : vector<1x8x1xf32> to vector<8x1xf32>
    %c0_28 = arith.constant 0 : index
    %c0_29 = arith.constant 0 : index
    %c0_30 = arith.constant 0 : index
    %67 = vector.load %arg8[%c0_28, %c0_29, %c0_30] : memref<1x1x8xf32, #tpu.memory_space<vmem>>, vector<1x1x8xf32>
    %68 = vector.shape_cast %67 : vector<1x1x8xf32> to vector<1x8xf32>
    %69 = vector.broadcast %66 : vector<8x1xf32> to vector<8x8xf32>
    %70 = vector.broadcast %68 : vector<1x8xf32> to vector<8x8xf32>
    %71 = arith.mulf %69, %70 : vector<8x8xf32>
    %cst_31 = arith.constant 0.000000e+00 : f32
    %72 = vector.broadcast %cst_31 : f32 to vector<8x8xf32>
    %73 = arith.cmpf ogt, %71, %72 : vector<8x8xf32>
    %74 = vector.shape_cast %73 : vector<8x8xi1> to vector<8x1x8xi1>
    %cst_32 = arith.constant -1.000000e+30 : f32
    %75 = vector.shape_cast %74 : vector<8x1x8xi1> to vector<8x1x8xi1>
    %76 = vector.broadcast %75 : vector<8x1x8xi1> to vector<8x32x8xi1>
    %77 = vector.broadcast %cst_32 : f32 to vector<8x32x8xf32>
    %78 = arith.select %76, %77, %64 : vector<8x32x8xi1>, vector<8x32x8xf32>
    %cst_33 = arith.constant dense<0xFF800000> : vector<8x32xf32>
    %79 = vector.multi_reduction <maximumf>, %78, %cst_33 [2] : vector<8x32x8xf32> to vector<8x32xf32>
    %80 = vector.shape_cast %79 : vector<8x32xf32> to vector<8x32x1xf32>
    %81 = vector.broadcast %80 : vector<8x32x1xf32> to vector<8x32x8xf32>
    %82 = arith.subf %78, %81 : vector<8x32x8xf32>
    %83 = math.exp %82 : vector<8x32x8xf32>
    %cst_34 = arith.constant dense<0.000000e+00> : vector<8x32xf32>
    %84 = vector.multi_reduction <add>, %83, %cst_34 [2] : vector<8x32x8xf32> to vector<8x32xf32>
    %85 = vector.shape_cast %5 : vector<32x8xf32> to vector<1x32x8xf32>
    %86 = vector.broadcast %85 : vector<1x32x8xf32> to vector<8x32x8xf32>
    %87 = arith.mulf %86, %83 : vector<8x32x8xf32>
    %cst_35 = arith.constant dense<0.000000e+00> : vector<8x32xf32>
    %88 = vector.multi_reduction <add>, %87, %cst_35 [2] : vector<8x32x8xf32> to vector<8x32xf32>
    %89 = arith.divf %88, %84 : vector<8x32xf32>
    %c0_36 = arith.constant 0 : index
    %c0_37 = arith.constant 0 : index
    %c0_38 = arith.constant 0 : index
    %90 = vector.load %arg13[%c0_36, %c0_37, %c0_38] : memref<1x8x32xf32, #tpu.memory_space<vmem>>, vector<1x8x32xf32>
    %91 = vector.shape_cast %90 : vector<1x8x32xf32> to vector<8x32xf32>
    %92 = vector.shape_cast %89 : vector<8x32xf32> to vector<1x8x32xf32>
    tpu.vector_store %arg13[%c0_36, %c0_37, %c0_38], %92 {strides = array<i32>} : memref<1x8x32xf32, #tpu.memory_space<vmem>>, vector<1x8x32xf32>,
    return
  }
  func.func @transform_0(%arg0: i32, %arg1: i32) -> (i32, i32, i32) {
    %c0_i32 = arith.constant 0 : i32
    %c0_i32_0 = arith.constant 0 : i32
    return %arg0, %arg1, %c0_i32 : i32, i32, i32
  }
  func.func @transform_1(%arg0: i32, %arg1: i32) -> (i32, i32, i32) {
    %c0_i32 = arith.constant 0 : i32
    %c0_i32_0 = arith.constant 0 : i32
    %c0_i32_1 = arith.constant 0 : i32
    return %arg0, %c0_i32, %c0_i32_0 : i32, i32, i32
  }
  func.func @transform_2(%arg0: i32, %arg1: i32) -> (i32, i32, i32) {
    %c0_i32 = arith.constant 0 : i32
    %c0_i32_0 = arith.constant 0 : i32
    %c0_i32_1 = arith.constant 0 : i32
    return %arg0, %c0_i32, %c0_i32_0 : i32, i32, i32
  }
  func.func @transform_3(%arg0: i32, %arg1: i32) -> (i32, i32, i32) {
    %c0_i32 = arith.constant 0 : i32
    %c0_i32_0 = arith.constant 0 : i32
    return %arg0, %arg1, %c0_i32 : i32, i32, i32
  }
  func.func @transform_4(%arg0: i32, %arg1: i32) -> (i32, i32, i32) {
    %c0_i32 = arith.constant 0 : i32
    %c0_i32_0 = arith.constant 0 : i32
    %c0_i32_1 = arith.constant 0 : i32
    return %arg0, %c0_i32, %c0_i32_0 : i32, i32, i32
  }
  func.func @transform_5(%arg0: i32, %arg1: i32) -> (i32, i32, i32) {
    %c0_i32 = arith.constant 0 : i32
    %c0_i32_0 = arith.constant 0 : i32
    return %arg0, %arg1, %c0_i32 : i32, i32, i32
  }
  func.func @transform_6(%arg0: i32, %arg1: i32) -> (i32, i32, i32) {
    %c0_i32 = arith.constant 0 : i32
    %c0_i32_0 = arith.constant 0 : i32
    %c0_i32_1 = arith.constant 0 : i32
    return %arg0, %c0_i32, %c0_i32_0 : i32, i32, i32
  }
  func.func @transform_7(%arg0: i32, %arg1: i32) -> (i32, i32) {
    %c0_i32 = arith.constant 0 : i32
    %c0_i32_0 = arith.constant 0 : i32
    %c0_i32_1 = arith.constant 0 : i32
    return %c0_i32, %c0_i32_0 : i32, i32
  }
  func.func @transform_8(%arg0: i32, %arg1: i32) -> (i32, i32) {
    %c0_i32 = arith.constant 0 : i32
    %c0_i32_0 = arith.constant 0 : i32
    %c0_i32_1 = arith.constant 0 : i32
    return %c0_i32, %c0_i32_0 : i32, i32
  }
  func.func @transform_9(%arg0: i32, %arg1: i32) -> (i32, i32) {
    %c0_i32 = arith.constant 0 : i32
    %c0_i32_0 = arith.constant 0 : i32
    %c0_i32_1 = arith.constant 0 : i32
    return %c0_i32, %c0_i32_0 : i32, i32
  }
  func.func @transform_10(%arg0: i32, %arg1: i32) -> (i32, i32) {
    %c0_i32 = arith.constant 0 : i32
    %c0_i32_0 = arith.constant 0 : i32
    %c0_i32_1 = arith.constant 0 : i32
    return %c0_i32, %c0_i32_0 : i32, i32
  }
  func.func @transform_11(%arg0: i32, %arg1: i32) -> (i32, i32, i32) {
    %c0_i32 = arith.constant 0 : i32
    %c0_i32_0 = arith.constant 0 : i32
    return %arg0, %arg1, %c0_i32 : i32, i32, i32
  }
}

</mosaic_0001>

<llo_original>
// kernel: tpu_custom_call.1
$region0: #{tpu_custom_call.1}
  #allocation0 [shape = 'u32[]', space=smem, size = 0x4, offset = 0x4, fixed_abs, tag = 'smem constant byte address 0x4 - core index']
  #allocation1 [shape = 'u32[72,128]{1,0:T(1,128)}', space=vmem, size = 0x9000, scoped, tag = 'internal scratch']
  %s0 = inlined_call_operand.vmem [shape: f32[2,8,32], index: 0, kind: input, shape index: {}]
  %s1 = inlined_call_operand.vmem [shape: f32[2,32,8], index: 1, kind: input, shape index: {}]
  %s2 = inlined_call_operand.vmem [shape: f32[2,32,8], index: 2, kind: input, shape index: {}]
  %s3 = inlined_call_operand.vmem [shape: f32[2,8,3], index: 3, kind: input, shape index: {}]
  %s4 = inlined_call_operand.vmem [shape: f32[2,3,8], index: 4, kind: input, shape index: {}]
  %s5 = inlined_call_operand.vmem [shape: f32[2,8,1], index: 5, kind: input, shape index: {}]
  %s6 = inlined_call_operand.vmem [shape: f32[2,1,8], index: 6, kind: input, shape index: {}]
  %s7 = inlined_call_operand.vmem [shape: f32[128,1], index: 7, kind: input, shape index: {}]
  %s8 = inlined_call_operand.vmem [shape: f32[128,1], index: 8, kind: input, shape index: {}]
  %s9 = inlined_call_operand.vmem [shape: f32[32,128], index: 9, kind: input, shape index: {}]
  %s10 = inlined_call_operand.vmem [shape: f32[1,32], index: 10, kind: input, shape index: {}]
  %s11 = inlined_call_operand.hbm [shape: f32[2,8,32], index: 11, kind: output, shape index: {}]
  %s12 = sld [smem:[#allocation0]]
  $region77: #{tpu_custom_call.1} parent=0
    _
  %s14 = ssub.s32 1, %s12
  %s15 = scalar_select 0, %s14, %s12
  $region1: #{tpu_custom_call.1} parent=0
    #allocation2 [shape = 'u8[8192]{0}', space=vmem, size = 0x2000, scoped, tag = 'output window, operand 0']
    #allocation3 [shape = 's32[2]{0}', space=sflag, size = 0x8, scoped, tag = 'scoped memory for tpu_custom_call.1']
    %16 = vsyncpa [#allocation3], 0
    %s17 = scalar_lea.sflag [#allocation3], 1
    %18 = vsyncpa %s17, 0
    loop: start=0, step=1, limit=4
    $region2: #{tpu_custom_call.1} parent=1 // loop_pre_header
      _
    $region3: #{tpu_custom_call.1} parent=1 // loop_header
      %s20 = sphi 0, %s24
      %p21 = scmp.ge.s32.totalorder %s20, 4
      %s27 = sphi 0, %s39
      %s28 = sphi 0, %s35
      %s29 = sphi 0, %s27
      %s30 = sphi 0, %s28
      %s31 = sphi 0, %s29
      %s32 = sphi 0, %s30
      %s44 = sphi 0, %s46
      %s47 = sphi 0, %s44
      %s48 = sphi 0, %s47
      %s64 = sphi 0, %s48
      %s70 = sphi 0, %s72
      %s73 = sphi 0, %s70
      %s74 = sphi 0, %s73
      %s90 = sphi 0, %s74
      %s96 = sphi 0, %s98
      %s99 = sphi 0, %s96
      %s100 = sphi 0, %s99
      %s116 = sphi 0, %s100
      %s124 = sphi 0, %s126
      %s127 = sphi 0, %s124
      %s128 = sphi 0, %s127
      %s144 = sphi 0, %s128
      %s150 = sphi 0, %s152
      %s153 = sphi 0, %s150
      %s154 = sphi 0, %s153
      %s170 = sphi 0, %s154
      %s178 = sphi 0, %s180
      %s181 = sphi 0, %s178
      %s182 = sphi 0, %s181
      %s198 = sphi 0, %s182
      %s204 = sphi 0, %s206
      %s207 = sphi 0, %s204
      %s208 = sphi 0, %s207
      %s224 = sphi 0, %s208
      %s228 = sphi 0, %s228
      %s230 = sphi 0, %s228
      %s231 = sphi 0, %s230
      %s245 = sphi 0, %s231
      %s249 = sphi 0, %s249
      %s251 = sphi 0, %s249
      %s252 = sphi 0, %s251
      %s266 = sphi 0, %s252
      %s270 = sphi 0, %s270
      %s272 = sphi 0, %s270
      %s273 = sphi 0, %s272
      %s287 = sphi 0, %s273
      %s291 = sphi 0, %s291
      %s293 = sphi 0, %s291
      %s294 = sphi 0, %s293
      %s308 = sphi 0, %s294
      %s316 = sphi 0, %s318
      %s319 = sphi 0, %s316
      %s320 = sphi 0, %s319
      %s336 = sphi 0, %s320
    $region4: #{tpu_custom_call.1} parent=1 // loop_header_branch
      %23 = sbr.rel (%p21) target = $region8
    $region5: #{tpu_custom_call.1} parent=1 // loop_body
      %s25 = ssub.s32 %s20, 1
      %s26 = ssub.s32 %s20, 2
      %s33 = sadd.s32 1, %s28
      %p34 = scmp.ge.s32.totalorder %s33, 1
      %s35 = scalar_select %p34, 0, %s33
      %s36 = sadd.s32 1, %s27
      %s37 = scalar_select %p34, %s36, %s27
      %p38 = scmp.ge.s32.totalorder %s37, 2
      %s39 = scalar_select %p38, 0, %s37
      %s40 = ssub.s32 %s27, %s39
      %s41 = ssub.s32 %s28, %s35
      %s42 = sor.u32 %s40, %s41
      %p43 = scmp.eq.s32.totalorder %s42, 0
      %s45 = sadd.s32 %s44, 1
      %s46 = scalar_select %p43, %s44, %s45
      %p49 = pneg %p43
      %p50 = scmp.eq.s32.totalorder %s20, 1
      %p51 = por %p49, %p50
      %p52 = scmp.ne.s32.totalorder %s44, %s47
      %p53 = scmp.eq.s32.totalorder %s20, 0
      %p54 = por %p52, %p53
      %p55 = scmp.ne.s32.totalorder %s44, %s47
      %p56 = scmp.eq.s32.totalorder %s25, 1
      %p57 = por %p55, %p56
      %p58 = scmp.ne.s32.totalorder %s47, %s48
      %p59 = scmp.eq.s32.totalorder %s25, 0
      %p60 = por %p58, %p59
      %p61 = scmp.ne.s32.totalorder %s47, %s48
      %p62 = scmp.eq.s32.totalorder %s26, 1
      %p63 = por %p61, %p62
      %p65 = scmp.ne.s32.totalorder %s48, %s64
      %p66 = scmp.eq.s32.totalorder %s26, 0
      %p67 = por %p65, %p66
      %s68 = ssub.s32 %s27, %s39
      %p69 = scmp.eq.s32.totalorder %s68, 0
      %s71 = sadd.s32 %s70, 1
      %s72 = scalar_select %p69, %s70, %s71
      %p75 = pneg %p69
      %p76 = scmp.eq.s32.totalorder %s20, 1
      %p77 = por %p75, %p76
      %p78 = scmp.ne.s32.totalorder %s70, %s73
      %p79 = scmp.eq.s32.totalorder %s20, 0
      %p80 = por %p78, %p79
      %p81 = scmp.ne.s32.totalorder %s70, %s73
      %p82 = scmp.eq.s32.totalorder %s25, 1
      %p83 = por %p81, %p82
      %p84 = scmp.ne.s32.totalorder %s73, %s74
      %p85 = scmp.eq.s32.totalorder %s25, 0
      %p86 = por %p84, %p85
      %p87 = scmp.ne.s32.totalorder %s73, %s74
      %p88 = scmp.eq.s32.totalorder %s26, 1
      %p89 = por %p87, %p88
      %p91 = scmp.ne.s32.totalorder %s74, %s90
      %p92 = scmp.eq.s32.totalorder %s26, 0
      %p93 = por %p91, %p92
      %s94 = ssub.s32 %s27, %s39
      %p95 = scmp.eq.s32.totalorder %s94, 0
      %s97 = sadd.s32 %s96, 1
      %s98 = scalar_select %p95, %s96, %s97
      %p101 = pneg %p95
      %p102 = scmp.eq.s32.totalorder %s20, 1
      %p103 = por %p101, %p102
      %p104 = scmp.ne.s32.totalorder %s96, %s99
      %p105 = scmp.eq.s32.totalorder %s20, 0
      %p106 = por %p104, %p105
      %p107 = scmp.ne.s32.totalorder %s96, %s99
      %p108 = scmp.eq.s32.totalorder %s25, 1
      %p109 = por %p107, %p108
      %p110 = scmp.ne.s32.totalorder %s99, %s100
      %p111 = scmp.eq.s32.totalorder %s25, 0
      %p112 = por %p110, %p111
      %p113 = scmp.ne.s32.totalorder %s99, %s100
      %p114 = scmp.eq.s32.totalorder %s26, 1
      %p115 = por %p113, %p114
      %p117 = scmp.ne.s32.totalorder %s100, %s116
      %p118 = scmp.eq.s32.totalorder %s26, 0
      %p119 = por %p117, %p118
      %s120 = ssub.s32 %s27, %s39
      %s121 = ssub.s32 %s28, %s35
      %s122 = sor.u32 %s120, %s121
      %p123 = scmp.eq.s32.totalorder %s122, 0
      %s125 = sadd.s32 %s124, 1
      %s126 = scalar_select %p123, %s124, %s125
      %p129 = pneg %p123
      %p130 = scmp.eq.s32.totalorder %s20, 1
      %p131 = por %p129, %p130
      %p132 = scmp.ne.s32.totalorder %s124, %s127
      %p133 = scmp.eq.s32.totalorder %s20, 0
      %p134 = por %p132, %p133
      %p135 = scmp.ne.s32.totalorder %s124, %s127
      %p136 = scmp.eq.s32.totalorder %s25, 1
      %p137 = por %p135, %p136
      %p138 = scmp.ne.s32.totalorder %s127, %s128
      %p139 = scmp.eq.s32.totalorder %s25, 0
      %p140 = por %p138, %p139
      %p141 = scmp.ne.s32.totalorder %s127, %s128
      %p142 = scmp.eq.s32.totalorder %s26, 1
      %p143 = por %p141, %p142
      %p145 = scmp.ne.s32.totalorder %s128, %s144
      %p146 = scmp.eq.s32.totalorder %s26, 0
      %p147 = por %p145, %p146
      %s148 = ssub.s32 %s27, %s39
      %p149 = scmp.eq.s32.totalorder %s148, 0
      %s151 = sadd.s32 %s150, 1
      %s152 = scalar_select %p149, %s150, %s151
      %p155 = pneg %p149
      %p156 = scmp.eq.s32.totalorder %s20, 1
      %p157 = por %p155, %p156
      %p158 = scmp.ne.s32.totalorder %s150, %s153
      %p159 = scmp.eq.s32.totalorder %s20, 0
      %p160 = por %p158, %p159
      %p161 = scmp.ne.s32.totalorder %s150, %s153
      %p162 = scmp.eq.s32.totalorder %s25, 1
      %p163 = por %p161, %p162
      %p164 = scmp.ne.s32.totalorder %s153, %s154
      %p165 = scmp.eq.s32.totalorder %s25, 0
      %p166 = por %p164, %p165
      %p167 = scmp.ne.s32.totalorder %s153, %s154
      %p168 = scmp.eq.s32.totalorder %s26, 1
      %p169 = por %p167, %p168
      %p171 = scmp.ne.s32.totalorder %s154, %s170
      %p172 = scmp.eq.s32.totalorder %s26, 0
      %p173 = por %p171, %p172
      %s174 = ssub.s32 %s27, %s39
      %s175 = ssub.s32 %s28, %s35
      %s176 = sor.u32 %s174, %s175
      %p177 = scmp.eq.s32.totalorder %s176, 0
      %s179 = sadd.s32 %s178, 1
      %s180 = scalar_select %p177, %s178, %s179
      %p183 = pneg %p177
      %p184 = scmp.eq.s32.totalorder %s20, 1
      %p185 = por %p183, %p184
      %p186 = scmp.ne.s32.totalorder %s178, %s181
      %p187 = scmp.eq.s32.totalorder %s20, 0
      %p188 = por %p186, %p187
      %p189 = scmp.ne.s32.totalorder %s178, %s181
      %p190 = scmp.eq.s32.totalorder %s25, 1
      %p191 = por %p189, %p190
      %p192 = scmp.ne.s32.totalorder %s181, %s182
      %p193 = scmp.eq.s32.totalorder %s25, 0
      %p194 = por %p192, %p193
      %p195 = scmp.ne.s32.totalorder %s181, %s182
      %p196 = scmp.eq.s32.totalorder %s26, 1
      %p197 = por %p195, %p196
      %p199 = scmp.ne.s32.totalorder %s182, %s198
      %p200 = scmp.eq.s32.totalorder %s26, 0
      %p201 = por %p199, %p200
      %s202 = ssub.s32 %s27, %s39
      %p203 = scmp.eq.s32.totalorder %s202, 0
      %s205 = sadd.s32 %s204, 1
      %s206 = scalar_select %p203, %s204, %s205
      %p209 = pneg %p203
      %p210 = scmp.eq.s32.totalorder %s20, 1
      %p211 = por %p209, %p210
      %p212 = scmp.ne.s32.totalorder %s204, %s207
      %p213 = scmp.eq.s32.totalorder %s20, 0
      %p214 = por %p212, %p213
      %p215 = scmp.ne.s32.totalorder %s204, %s207
      %p216 = scmp.eq.s32.totalorder %s25, 1
      %p217 = por %p215, %p216
      %p218 = scmp.ne.s32.totalorder %s207, %s208
      %p219 = scmp.eq.s32.totalorder %s25, 0
      %p220 = por %p218, %p219
      %p221 = scmp.ne.s32.totalorder %s207, %s208
      %p222 = scmp.eq.s32.totalorder %s26, 1
      %p223 = por %p221, %p222
      %p225 = scmp.ne.s32.totalorder %s208, %s224
      %p226 = scmp.eq.s32.totalorder %s26, 0
      %p227 = por %p225, %p226
      %s229 = sadd.s32 %s228, 1
      %p232 = scmp.eq.s32.totalorder %s20, 1
      %p233 = scmp.ne.s32.totalorder %s228, %s230
      %p234 = scmp.eq.s32.totalorder %s20, 0
      %p235 = por %p233, %p234
      %p236 = scmp.ne.s32.totalorder %s228, %s230
      %p237 = scmp.eq.s32.totalorder %s25, 1
      %p238 = por %p236, %p237
      %p239 = scmp.ne.s32.totalorder %s230, %s231
      %p240 = scmp.eq.s32.totalorder %s25, 0
      %p241 = por %p239, %p240
      %p242 = scmp.ne.s32.totalorder %s230, %s231
      %p243 = scmp.eq.s32.totalorder %s26, 1
      %p244 = por %p242, %p243
      %p246 = scmp.ne.s32.totalorder %s231, %s245
      %p247 = scmp.eq.s32.totalorder %s26, 0
      %p248 = por %p246, %p247
      %s250 = sadd.s32 %s249, 1
      %p253 = scmp.eq.s32.totalorder %s20, 1
      %p254 = scmp.ne.s32.totalorder %s249, %s251
      %p255 = scmp.eq.s32.totalorder %s20, 0
      %p256 = por %p254, %p255
      %p257 = scmp.ne.s32.totalorder %s249, %s251
      %p258 = scmp.eq.s32.totalorder %s25, 1
      %p259 = por %p257, %p258
      %p260 = scmp.ne.s32.totalorder %s251, %s252
      %p261 = scmp.eq.s32.totalorder %s25, 0
      %p262 = por %p260, %p261
      %p263 = scmp.ne.s32.totalorder %s251, %s252
      %p264 = scmp.eq.s32.totalorder %s26, 1
      %p265 = por %p263, %p264
      %p267 = scmp.ne.s32.totalorder %s252, %s266
      %p268 = scmp.eq.s32.totalorder %s26, 0
      %p269 = por %p267, %p268
      %s271 = sadd.s32 %s270, 1
      %p274 = scmp.eq.s32.totalorder %s20, 1
      %p275 = scmp.ne.s32.totalorder %s270, %s272
      %p276 = scmp.eq.s32.totalorder %s20, 0
      %p277 = por %p275, %p276
      %p278 = scmp.ne.s32.totalorder %s270, %s272
      %p279 = scmp.eq.s32.totalorder %s25, 1
      %p280 = por %p278, %p279
      %p281 = scmp.ne.s32.totalorder %s272, %s273
      %p282 = scmp.eq.s32.totalorder %s25, 0
      %p283 = por %p281, %p282
      %p284 = scmp.ne.s32.totalorder %s272, %s273
      %p285 = scmp.eq.s32.totalorder %s26, 1
      %p286 = por %p284, %p285
      %p288 = scmp.ne.s32.totalorder %s273, %s287
      %p289 = scmp.eq.s32.totalorder %s26, 0
      %p290 = por %p288, %p289
      %s292 = sadd.s32 %s291, 1
      %p295 = scmp.eq.s32.totalorder %s20, 1
      %p296 = scmp.ne.s32.totalorder %s291, %s293
      %p297 = scmp.eq.s32.totalorder %s20, 0
      %p298 = por %p296, %p297
      %p299 = scmp.ne.s32.totalorder %s291, %s293
      %p300 = scmp.eq.s32.totalorder %s25, 1
      %p301 = por %p299, %p300
      %p302 = scmp.ne.s32.totalorder %s293, %s294
      %p303 = scmp.eq.s32.totalorder %s25, 0
      %p304 = por %p302, %p303
      %p305 = scmp.ne.s32.totalorder %s293, %s294
      %p306 = scmp.eq.s32.totalorder %s26, 1
      %p307 = por %p305, %p306
      %p309 = scmp.ne.s32.totalorder %s294, %s308
      %p310 = scmp.eq.s32.totalorder %s26, 0
      %p311 = por %p309, %p310
      %s312 = ssub.s32 %s27, %s39
      %s313 = ssub.s32 %s28, %s35
      %s314 = sor.u32 %s312, %s313
      %p315 = scmp.eq.s32.totalorder %s314, 0
      %s317 = sadd.s32 %s316, 1
      %s318 = scalar_select %p315, %s316, %s317
      %p321 = pneg %p315
      %p322 = scmp.eq.s32.totalorder %s20, 1
      %p323 = por %p321, %p322
      %p324 = scmp.ne.s32.totalorder %s316, %s319
      %p325 = scmp.eq.s32.totalorder %s20, 0
      %p326 = por %p324, %p325
      %p327 = scmp.ne.s32.totalorder %s316, %s319
      %p328 = scmp.eq.s32.totalorder %s25, 1
      %p329 = por %p327, %p328
      %p330 = scmp.ne.s32.totalorder %s319, %s320
      %p331 = scmp.eq.s32.totalorder %s25, 0
      %p332 = por %p330, %p331
      %p333 = scmp.ne.s32.totalorder %s319, %s320
      %p334 = scmp.eq.s32.totalorder %s26, 1
      %p335 = por %p333, %p334
      %p337 = scmp.ne.s32.totalorder %s320, %s336
      %p338 = scmp.eq.s32.totalorder %s26, 0
      %p339 = por %p337, %p338
      %p340 = scmp.le.s32.totalorder 1, %s20
      %p341 = scmp.lt.s32.totalorder %s20, 3
      %p342 = pnand %p340, %p341
      %p343 = pneg %p342
      // Predicated region
      $region9: #{tpu_custom_call.1} parent=5 // pred_check
        _
      $region10: #{tpu_custom_call.1} parent=5 // pred_check_branch
        %345 = sbr.rel (%p342) target = $region12
      $region11: #{tpu_custom_call.1} parent=5 // pred_region
        %s346 = ssub.s32 %s20, 1
        // Predicated region
        $region13: #{tpu_custom_call.1} parent=11 // pred_check
          %p347 = pneg %p241
        $region14: #{tpu_custom_call.1} parent=11 // pred_check_branch
          %349 = sbr.rel (%p347) target = $region16
        $region15: #{tpu_custom_call.1} parent=11 // pred_region
          _
        $region16: #{tpu_custom_call.1} parent=11 // pred_fallthru
          _
        // Predicated region
        $region17: #{tpu_custom_call.1} parent=11 // pred_check
          %p350 = pneg %p262
        $region18: #{tpu_custom_call.1} parent=11 // pred_check_branch
          %352 = sbr.rel (%p350) target = $region20
        $region19: #{tpu_custom_call.1} parent=11 // pred_region
          _
        $region20: #{tpu_custom_call.1} parent=11 // pred_fallthru
          _
        // Predicated region
        $region21: #{tpu_custom_call.1} parent=11 // pred_check
          %p353 = pneg %p283
        $region22: #{tpu_custom_call.1} parent=11 // pred_check_branch
          %355 = sbr.rel (%p353) target = $region24
        $region23: #{tpu_custom_call.1} parent=11 // pred_region
          _
        $region24: #{tpu_custom_call.1} parent=11 // pred_fallthru
          _
        // Predicated region
        $region25: #{tpu_custom_call.1} parent=11 // pred_check
          %p356 = pneg %p304
        $region26: #{tpu_custom_call.1} parent=11 // pred_check_branch
          %358 = sbr.rel (%p356) target = $region28
        $region27: #{tpu_custom_call.1} parent=11 // pred_region
          _
        $region28: #{tpu_custom_call.1} parent=11 // pred_fallthru
          _
      $region12: #{tpu_custom_call.1} parent=5 // pred_fallthru
        _
      %p359 = scmp.lt.s32.totalorder %s20, 2
      // Predicated region
      $region29: #{tpu_custom_call.1} parent=5 // pred_check
        %p360 = pneg %p359
      $region30: #{tpu_custom_call.1} parent=5 // pred_check_branch
        %362 = sbr.rel (%p360) target = $region32
      $region31: #{tpu_custom_call.1} parent=5 // pred_region
        // Predicated region
        $region33: #{tpu_custom_call.1} parent=31 // pred_check
          %p363 = pneg %p54
        $region34: #{tpu_custom_call.1} parent=31 // pred_check_branch
          %365 = sbr.rel (%p363) target = $region36
        $region35: #{tpu_custom_call.1} parent=31 // pred_region
          %p366 = scmp.lt.s32.totalorder %s27, 1
          %s367 = scalar_select %p366, %s27, 1
          %p368 = scmp.lt.s32.totalorder %s28, 0
          %s369 = scalar_select %p368, %s28, 0
          %s370 = sadd.s32 %s369, %s367
          %s371 = smul.addr %s370, 8
          %s372 = scalar_lea.vmem %s0, %s371
        $region36: #{tpu_custom_call.1} parent=31 // pred_fallthru
          _
        // Predicated region
        $region37: #{tpu_custom_call.1} parent=31 // pred_check
          %p373 = pneg %p80
        $region38: #{tpu_custom_call.1} parent=31 // pred_check_branch
          %375 = sbr.rel (%p373) target = $region40
        $region39: #{tpu_custom_call.1} parent=31 // pred_region
          %p376 = scmp.lt.s32.totalorder %s27, 1
          %s377 = scalar_select %p376, %s27, 1
          %s378 = smul.addr %s377, 4
          %s379 = smul.addr %s378, 8
          %s380 = scalar_lea.vmem %s1, %s379
        $region40: #{tpu_custom_call.1} parent=31 // pred_fallthru
          _
        // Predicated region
        $region41: #{tpu_custom_call.1} parent=31 // pred_check
          %p381 = pneg %p106
        $region42: #{tpu_custom_call.1} parent=31 // pred_check_branch
          %383 = sbr.rel (%p381) target = $region44
        $region43: #{tpu_custom_call.1} parent=31 // pred_region
          %p384 = scmp.lt.s32.totalorder %s27, 1
          %s385 = scalar_select %p384, %s27, 1
          %s386 = smul.addr %s385, 4
          %s387 = smul.addr %s386, 8
          %s388 = scalar_lea.vmem %s2, %s387
        $region44: #{tpu_custom_call.1} parent=31 // pred_fallthru
          _
        // Predicated region
        $region45: #{tpu_custom_call.1} parent=31 // pred_check
          %p389 = pneg %p134
        $region46: #{tpu_custom_call.1} parent=31 // pred_check_branch
          %391 = sbr.rel (%p389) target = $region48
        $region47: #{tpu_custom_call.1} parent=31 // pred_region
          %p392 = scmp.lt.s32.totalorder %s27, 1
          %s393 = scalar_select %p392, %s27, 1
          %p394 = scmp.lt.s32.totalorder %s28, 0
          %s395 = scalar_select %p394, %s28, 0
          %s396 = sadd.s32 %s395, %s393
          %s397 = smul.addr %s396, 8
          %s398 = scalar_lea.vmem %s3, %s397
        $region48: #{tpu_custom_call.1} parent=31 // pred_fallthru
          _
        // Predicated region
        $region49: #{tpu_custom_call.1} parent=31 // pred_check
          %p399 = pneg %p160
        $region50: #{tpu_custom_call.1} parent=31 // pred_check_branch
          %401 = sbr.rel (%p399) target = $region52
        $region51: #{tpu_custom_call.1} parent=31 // pred_region
          %p402 = scmp.lt.s32.totalorder %s27, 1
          %s403 = scalar_select %p402, %s27, 1
          %s404 = smul.addr %s403, 4
          %s405 = scalar_lea.vmem %s4, %s404
        $region52: #{tpu_custom_call.1} parent=31 // pred_fallthru
          _
        // Predicated region
        $region53: #{tpu_custom_call.1} parent=31 // pred_check
          %p406 = pneg %p188
        $region54: #{tpu_custom_call.1} parent=31 // pred_check_branch
          %408 = sbr.rel (%p406) target = $region56
        $region55: #{tpu_custom_call.1} parent=31 // pred_region
          %p409 = scmp.lt.s32.totalorder %s27, 1
          %s410 = scalar_select %p409, %s27, 1
          %p411 = scmp.lt.s32.totalorder %s28, 0
          %s412 = scalar_select %p411, %s28, 0
          %s413 = sadd.s32 %s412, %s410
          %s414 = smul.addr %s413, 8
          %s415 = scalar_lea.vmem %s5, %s414
        $region56: #{tpu_custom_call.1} parent=31 // pred_fallthru
          _
        // Predicated region
        $region57: #{tpu_custom_call.1} parent=31 // pred_check
          %p416 = pneg %p214
        $region58: #{tpu_custom_call.1} parent=31 // pred_check_branch
          %418 = sbr.rel (%p416) target = $region60
        $region59: #{tpu_custom_call.1} parent=31 // pred_region
          %p419 = scmp.lt.s32.totalorder %s27, 1
          %s420 = scalar_select %p419, %s27, 1
          %s421 = scalar_lea.vmem %s6, %s420
        $region60: #{tpu_custom_call.1} parent=31 // pred_fallthru
          _
      $region32: #{tpu_custom_call.1} parent=5 // pred_fallthru
        _
      %p422 = scmp.le.s32.totalorder 1, %s20
      %p423 = scmp.lt.s32.totalorder %s20, 3
      %p424 = pnand %p422, %p423
      %p425 = pneg %p424
      // Predicated region
      $region61: #{tpu_custom_call.1} parent=5 // pred_check
        _
      $region62: #{tpu_custom_call.1} parent=5 // pred_check_branch
        %427 = sbr.rel (%p424) target = $region64
      $region63: #{tpu_custom_call.1} parent=5 // pred_region
        %s428 = ssub.s32 %s20, 1
        %p429 = scmp.lt.s32.totalorder %s29, 1
        %s430 = scalar_select %p429, %s29, 1
        %p431 = scmp.lt.s32.totalorder %s30, 0
        %s432 = scalar_select %p431, %s30, 0
        %s433 = sadd.s32 %s432, %s430
        %s434 = smul.addr %s433, 8
        %s435 = scalar_lea.vmem %s0, %s434
        %p436 = pneg %p60
        %p437 = pneg %p57
        %p438 = scmp.lt.s32.totalorder %s29, 1
        %s439 = scalar_select %p438, %s29, 1
        %s440 = smul.addr %s439, 4
        %s441 = smul.addr %s440, 8
        %s442 = scalar_lea.vmem %s1, %s441
        %p443 = pneg %p86
        %p444 = pneg %p83
        %p445 = scmp.lt.s32.totalorder %s29, 1
        %s446 = scalar_select %p445, %s29, 1
        %s447 = smul.addr %s446, 4
        %s448 = smul.addr %s447, 8
        %s449 = scalar_lea.vmem %s2, %s448
        %p450 = pneg %p112
        %p451 = pneg %p109
        %p452 = scmp.lt.s32.totalorder %s29, 1
        %s453 = scalar_select %p452, %s29, 1
        %p454 = scmp.lt.s32.totalorder %s30, 0
        %s455 = scalar_select %p454, %s30, 0
        %s456 = sadd.s32 %s455, %s453
        %s457 = smul.addr %s456, 8
        %s458 = scalar_lea.vmem %s3, %s457
        %p459 = pneg %p140
        %p460 = pneg %p137
        %p461 = scmp.lt.s32.totalorder %s29, 1
        %s462 = scalar_select %p461, %s29, 1
        %s463 = smul.addr %s462, 4
        %s464 = scalar_lea.vmem %s4, %s463
        %p465 = pneg %p166
        %p466 = pneg %p163
        %p467 = scmp.lt.s32.totalorder %s29, 1
        %s468 = scalar_select %p467, %s29, 1
        %p469 = scmp.lt.s32.totalorder %s30, 0
        %s470 = scalar_select %p469, %s30, 0
        %s471 = sadd.s32 %s470, %s468
        %s472 = smul.addr %s471, 8
        %s473 = scalar_lea.vmem %s5, %s472
        %p474 = pneg %p194
        %p475 = pneg %p191
        %p476 = scmp.lt.s32.totalorder %s29, 1
        %s477 = scalar_select %p476, %s29, 1
        %s478 = scalar_lea.vmem %s6, %s477
        %p479 = pneg %p220
        %p480 = pneg %p217
        %p481 = pneg %p241
        %p482 = pneg %p238
        %p483 = pneg %p262
        %p484 = pneg %p259
        %p485 = pneg %p283
        %p486 = pneg %p280
        %p487 = pneg %p304
        %p488 = pneg %p301
        %p489 = pneg %p332
        %p490 = pneg %p329
        %s491 = sand.u32 %s319, 1
        %s492 = scalar_lea.sflag [#allocation3], %s491
        %s493 = sand.u32 %s319, 1
        %s494 = smul.addr %s493, 8
        %s495 = scalar_lea.vmem [#allocation2], %s494
        %p496 = scmp.lt.s32.totalorder %s29, 1
        %s497 = scalar_select %p496, %s29, 1
        %p498 = scmp.lt.s32.totalorder %s30, 0
        %s499 = scalar_select %p498, %s30, 0
        %s500 = sadd.s32 %s499, %s497
        %s501 = smul.addr %s500, 8
        %s502 = scalar_lea.vmem %s0, %s501
        %p503 = scmp.lt.s32.totalorder %s29, 1
        %s504 = scalar_select %p503, %s29, 1
        %s505 = smul.addr %s504, 4
        %s506 = smul.addr %s505, 8
        %s507 = scalar_lea.vmem %s1, %s506
        %p508 = scmp.lt.s32.totalorder %s29, 1
        %s509 = scalar_select %p508, %s29, 1
        %s510 = smul.addr %s509, 4
        %s511 = smul.addr %s510, 8
        %s512 = scalar_lea.vmem %s2, %s511
        %p513 = scmp.lt.s32.totalorder %s29, 1
        %s514 = scalar_select %p513, %s29, 1
        %p515 = scmp.lt.s32.totalorder %s30, 0
        %s516 = scalar_select %p515, %s30, 0
        %s517 = sadd.s32 %s516, %s514
        %s518 = smul.addr %s517, 8
        %s519 = scalar_lea.vmem %s3, %s518
        %p520 = scmp.lt.s32.totalorder %s29, 1
        %s521 = scalar_select %p520, %s29, 1
        %s522 = smul.addr %s521, 4
        %s523 = scalar_lea.vmem %s4, %s522
        %p524 = scmp.lt.s32.totalorder %s29, 1
        %s525 = scalar_select %p524, %s29, 1
        %p526 = scmp.lt.s32.totalorder %s30, 0
        %s527 = scalar_select %p526, %s30, 0
        %s528 = sadd.s32 %s527, %s525
        %s529 = smul.addr %s528, 8
        %s530 = scalar_lea.vmem %s5, %s529
        %p531 = scmp.lt.s32.totalorder %s29, 1
        %s532 = scalar_select %p531, %s29, 1
        %s533 = scalar_lea.vmem %s6, %s532
        %v534 = vld [vmem:[%s502] sm:$0xff]
        %v535 = vld [vmem:[%s507] sm:$0xff]
        %v536 = vld [vmem:[%s507 + $0x8] sm:$0xff]
        %v537 = vld [vmem:[%s507 + $0x10] sm:$0xff]
        %v538 = vld [vmem:[%s507 + $0x18] sm:$0xff]
        %v539 = vld [vmem:[%s512] sm:$0xff]
        %v540 = vld [vmem:[%s512 + $0x8] sm:$0xff]
        %v541 = vld [vmem:[%s512 + $0x10] sm:$0xff]
        %v542 = vld [vmem:[%s512 + $0x18] sm:$0xff]
        %v543 = vld [vmem:[%s519] sm:$0xff]
        %v544 = vld [vmem:[%s523] sm:$0x7]
        %546 = vset.pattern.permute.xlu0 0
        %547 = vperm.xlu0 %546, %v543
        %v548 = vpop.permute.xlu0 %547
        %v550 = vperm.slane %v544, 0
        %v551 = vsub.f32 %v548, %v550
        %v552 = vmul.f32 %v551, %v551
        %v553 = vadd.f32 %v552, 0.0
        %554 = vset.pattern.permute.xlu0 1
        %555 = vperm.xlu0 %554, %v543
        %v556 = vpop.permute.xlu0 %555
        %v558 = vperm.slane %v544, 1
        %v559 = vsub.f32 %v556, %v558
        %v560 = vmul.f32 %v559, %v559
        %v561 = vadd.f32 %v553, %v560
        %562 = vset.pattern.permute.xlu0 2
        %563 = vperm.xlu0 %562, %v543
        %v564 = vpop.permute.xlu0 %563
        %v566 = vperm.slane %v544, 2
        %v567 = vsub.f32 %v564, %v566
        %v568 = vmul.f32 %v567, %v567
        %v569 = vadd.f32 %v561, %v568
        %v570 = vrsqrt.pop %v569
        %v571 = vmul.f32 %v570, %v569
        %v572 = vmul.f32 %v571, %v570
        %v573 = vmul.f32 0.5, %v572
        %v574 = vsub.f32 1.5, %v573
        %v575 = vmul.f32 %v570, %v574
        %v576 = vmul.f32 %v569, %v575
        %vm577 = vcmp.eq.f32.partialorder %v569, inf
        %v578 = vsel %vm577, %v569, %v576
        %vm579 = vcmp.eq.f32.partialorder %v569, 0.0
        %v580 = vand.u32 %v569, 2147483648
        %v581 = vsel %vm579, %v580, %v578
        %v583 = vrot.slane %v581, 1
        %v584 = vrot.slane %v581, 2
        %v585 = vrot.slane %v581, 3
        %v586 = vrot.slane %v581, 4
        %v587 = vrot.slane %v581, 5
        %v588 = vrot.slane %v581, 6
        %v589 = vrot.slane %v581, 7
        %v590 = vld [vmem:[%s7] sm:$0xff]
        %v591 = vld [vmem:[%s7 + $0x8] sm:$0xff]
        %v592 = vld [vmem:[%s7 + $0x10] sm:$0xff]
        %v593 = vld [vmem:[%s7 + $0x18] sm:$0xff]
        %v594 = vld [vmem:[%s7 + $0x20] sm:$0xff]
        %v595 = vld [vmem:[%s7 + $0x28] sm:$0xff]
        %v596 = vld [vmem:[%s7 + $0x30] sm:$0xff]
        %v597 = vld [vmem:[%s7 + $0x38] sm:$0xff]
        %v598 = vld [vmem:[%s7 + $0x40] sm:$0xff]
        %v599 = vld [vmem:[%s7 + $0x48] sm:$0xff]
        %v600 = vld [vmem:[%s7 + $0x50] sm:$0xff]
        %v601 = vld [vmem:[%s7 + $0x58] sm:$0xff]
        %v602 = vld [vmem:[%s7 + $0x60] sm:$0xff]
        %v603 = vld [vmem:[%s7 + $0x68] sm:$0xff]
        %v604 = vld [vmem:[%s7 + $0x70] sm:$0xff]
        %v605 = vld [vmem:[%s7 + $0x78] sm:$0xff]
        %v606 = vperm.slane %v581, 0
        %v607 = vperm.slane %v583, 0
        %v608 = vperm.slane %v584, 0
        %v609 = vperm.slane %v585, 0
        %v610 = vperm.slane %v586, 0
        %v611 = vperm.slane %v587, 0
        %v612 = vperm.slane %v588, 0
        %v613 = vperm.slane %v589, 0
        %623 = vset.pattern.permute.xlu0 0
        %624 = vperm.xlu0 %623, %v590
        %v625 = vpop.permute.xlu0 %624
        %628 = vset.pattern.permute.xlu0 0
        %629 = vperm.xlu0 %628, %v591
        %v630 = vpop.permute.xlu0 %629
        %633 = vset.pattern.permute.xlu0 0
        %634 = vperm.xlu0 %633, %v592
        %v635 = vpop.permute.xlu0 %634
        %638 = vset.pattern.permute.xlu0 0
        %639 = vperm.xlu0 %638, %v593
        %v640 = vpop.permute.xlu0 %639
        %643 = vset.pattern.permute.xlu0 0
        %644 = vperm.xlu0 %643, %v594
        %v645 = vpop.permute.xlu0 %644
        %648 = vset.pattern.permute.xlu0 0
        %649 = vperm.xlu0 %648, %v595
        %v650 = vpop.permute.xlu0 %649
        %653 = vset.pattern.permute.xlu0 0
        %654 = vperm.xlu0 %653, %v596
        %v655 = vpop.permute.xlu0 %654
        %658 = vset.pattern.permute.xlu0 0
        %659 = vperm.xlu0 %658, %v597
        %v660 = vpop.permute.xlu0 %659
        %663 = vset.pattern.permute.xlu0 0
        %664 = vperm.xlu0 %663, %v598
        %v665 = vpop.permute.xlu0 %664
        %668 = vset.pattern.permute.xlu0 0
        %669 = vperm.xlu0 %668, %v599
        %v670 = vpop.permute.xlu0 %669
        %673 = vset.pattern.permute.xlu0 0
        %674 = vperm.xlu0 %673, %v600
        %v675 = vpop.permute.xlu0 %674
        %678 = vset.pattern.permute.xlu0 0
        %679 = vperm.xlu0 %678, %v601
        %v680 = vpop.permute.xlu0 %679
        %683 = vset.pattern.permute.xlu0 0
        %684 = vperm.xlu0 %683, %v602
        %v685 = vpop.permute.xlu0 %684
        %688 = vset.pattern.permute.xlu0 0
        %689 = vperm.xlu0 %688, %v603
        %v690 = vpop.permute.xlu0 %689
        %693 = vset.pattern.permute.xlu0 0
        %694 = vperm.xlu0 %693, %v604
        %v695 = vpop.permute.xlu0 %694
        %698 = vset.pattern.permute.xlu0 0
        %699 = vperm.xlu0 %698, %v605
        %v700 = vpop.permute.xlu0 %699
        %v702 = vmul.f32 %v606, %v625
        %v703 = vmul.f32 %v606, %v630
        %v704 = vmul.f32 %v606, %v635
        %v705 = vmul.f32 %v606, %v640
        %v706 = vmul.f32 %v606, %v645
        %v707 = vmul.f32 %v606, %v650
        %v708 = vmul.f32 %v606, %v655
        %v709 = vmul.f32 %v606, %v660
        %v710 = vmul.f32 %v606, %v665
        %v711 = vmul.f32 %v606, %v670
        %v712 = vmul.f32 %v606, %v675
        %v713 = vmul.f32 %v606, %v680
        %v714 = vmul.f32 %v606, %v685
        %v715 = vmul.f32 %v606, %v690
        %v716 = vmul.f32 %v606, %v695
        %v717 = vmul.f32 %v606, %v700
        %v718 = vmul.f32 %v607, %v625
        %v719 = vmul.f32 %v607, %v630
        %v720 = vmul.f32 %v607, %v635
        %v721 = vmul.f32 %v607, %v640
        %v722 = vmul.f32 %v607, %v645
        %v723 = vmul.f32 %v607, %v650
        %v724 = vmul.f32 %v607, %v655
        %v725 = vmul.f32 %v607, %v660
        %v726 = vmul.f32 %v607, %v665
        %v727 = vmul.f32 %v607, %v670
        %v728 = vmul.f32 %v607, %v675
        %v729 = vmul.f32 %v607, %v680
        %v730 = vmul.f32 %v607, %v685
        %v731 = vmul.f32 %v607, %v690
        %v732 = vmul.f32 %v607, %v695
        %v733 = vmul.f32 %v607, %v700
        %v734 = vmul.f32 %v608, %v625
        %v735 = vmul.f32 %v608, %v630
        %v736 = vmul.f32 %v608, %v635
        %v737 = vmul.f32 %v608, %v640
        %v738 = vmul.f32 %v608, %v645
        %v739 = vmul.f32 %v608, %v650
        %v740 = vmul.f32 %v608, %v655
        %v741 = vmul.f32 %v608, %v660
        %v742 = vmul.f32 %v608, %v665
        %v743 = vmul.f32 %v608, %v670
        %v744 = vmul.f32 %v608, %v675
        %v745 = vmul.f32 %v608, %v680
        %v746 = vmul.f32 %v608, %v685
        %v747 = vmul.f32 %v608, %v690
        %v748 = vmul.f32 %v608, %v695
        %v749 = vmul.f32 %v608, %v700
        %v750 = vmul.f32 %v609, %v625
        %v751 = vmul.f32 %v609, %v630
        %v752 = vmul.f32 %v609, %v635
        %v753 = vmul.f32 %v609, %v640
        %v754 = vmul.f32 %v609, %v645
        %v755 = vmul.f32 %v609, %v650
        %v756 = vmul.f32 %v609, %v655
        %v757 = vmul.f32 %v609, %v660
        %v758 = vmul.f32 %v609, %v665
        %v759 = vmul.f32 %v609, %v670
        %v760 = vmul.f32 %v609, %v675
        %v761 = vmul.f32 %v609, %v680
        %v762 = vmul.f32 %v609, %v685
        %v763 = vmul.f32 %v609, %v690
        %v764 = vmul.f32 %v609, %v695
        %v765 = vmul.f32 %v609, %v700
        %v766 = vmul.f32 %v610, %v625
        %v767 = vmul.f32 %v610, %v630
        %v768 = vmul.f32 %v610, %v635
        %v769 = vmul.f32 %v610, %v640
        %v770 = vmul.f32 %v610, %v645
        %v771 = vmul.f32 %v610, %v650
        %v772 = vmul.f32 %v610, %v655
        %v773 = vmul.f32 %v610, %v660
        %v774 = vmul.f32 %v610, %v665
        %v775 = vmul.f32 %v610, %v670
        %v776 = vmul.f32 %v610, %v675
        %v777 = vmul.f32 %v610, %v680
        %v778 = vmul.f32 %v610, %v685
        %v779 = vmul.f32 %v610, %v690
        %v780 = vmul.f32 %v610, %v695
        %v781 = vmul.f32 %v610, %v700
        %v782 = vmul.f32 %v611, %v625
        %v783 = vmul.f32 %v611, %v630
        %v784 = vmul.f32 %v611, %v635
        %v785 = vmul.f32 %v611, %v640
        %v786 = vmul.f32 %v611, %v645
        %v787 = vmul.f32 %v611, %v650
        %v788 = vmul.f32 %v611, %v655
        %v789 = vmul.f32 %v611, %v660
        %v790 = vmul.f32 %v611, %v665
        %v791 = vmul.f32 %v611, %v670
        %v792 = vmul.f32 %v611, %v675
        %v793 = vmul.f32 %v611, %v680
        %v794 = vmul.f32 %v611, %v685
        %v795 = vmul.f32 %v611, %v690
        %v796 = vmul.f32 %v611, %v695
        %v797 = vmul.f32 %v611, %v700
        %v798 = vmul.f32 %v612, %v625
        %v799 = vmul.f32 %v612, %v630
        %v800 = vmul.f32 %v612, %v635
        %v801 = vmul.f32 %v612, %v640
        %v802 = vmul.f32 %v612, %v645
        %v803 = vmul.f32 %v612, %v650
        %v804 = vmul.f32 %v612, %v655
        %v805 = vmul.f32 %v612, %v660
        %v806 = vmul.f32 %v612, %v665
        %v807 = vmul.f32 %v612, %v670
        %v808 = vmul.f32 %v612, %v675
        %v809 = vmul.f32 %v612, %v680
        %v810 = vmul.f32 %v612, %v685
        %v811 = vmul.f32 %v612, %v690
        %v812 = vmul.f32 %v612, %v695
        %v813 = vmul.f32 %v612, %v700
        %v814 = vmul.f32 %v613, %v625
        %v815 = vmul.f32 %v613, %v630
        %v816 = vmul.f32 %v613, %v635
        %v817 = vmul.f32 %v613, %v640
        %v818 = vmul.f32 %v613, %v645
        %v819 = vmul.f32 %v613, %v650
        %v820 = vmul.f32 %v613, %v655
        %v821 = vmul.f32 %v613, %v660
        %v822 = vmul.f32 %v613, %v665
        %v823 = vmul.f32 %v613, %v670
        %v824 = vmul.f32 %v613, %v675
        %v825 = vmul.f32 %v613, %v680
        %v826 = vmul.f32 %v613, %v685
        %v827 = vmul.f32 %v613, %v690
        %v828 = vmul.f32 %v613, %v695
        %v829 = vmul.f32 %v613, %v700
        %v830 = vld [vmem:[%s8] sm:$0xff]
        %v831 = vld [vmem:[%s8 + $0x8] sm:$0xff]
        %v832 = vld [vmem:[%s8 + $0x10] sm:$0xff]
        %v833 = vld [vmem:[%s8 + $0x18] sm:$0xff]
        %v834 = vld [vmem:[%s8 + $0x20] sm:$0xff]
        %v835 = vld [vmem:[%s8 + $0x28] sm:$0xff]
        %v836 = vld [vmem:[%s8 + $0x30] sm:$0xff]
        %v837 = vld [vmem:[%s8 + $0x38] sm:$0xff]
        %v838 = vld [vmem:[%s8 + $0x40] sm:$0xff]
        %v839 = vld [vmem:[%s8 + $0x48] sm:$0xff]
        %v840 = vld [vmem:[%s8 + $0x50] sm:$0xff]
        %v841 = vld [vmem:[%s8 + $0x58] sm:$0xff]
        %v842 = vld [vmem:[%s8 + $0x60] sm:$0xff]
        %v843 = vld [vmem:[%s8 + $0x68] sm:$0xff]
        %v844 = vld [vmem:[%s8 + $0x70] sm:$0xff]
        %v845 = vld [vmem:[%s8 + $0x78] sm:$0xff]
        %847 = vset.pattern.permute.xlu0 0
        %848 = vperm.xlu0 %847, %v830
        %v849 = vpop.permute.xlu0 %848
        %852 = vset.pattern.permute.xlu0 0
        %853 = vperm.xlu0 %852, %v831
        %v854 = vpop.permute.xlu0 %853
        %857 = vset.pattern.permute.xlu0 0
        %858 = vperm.xlu0 %857, %v832
        %v859 = vpop.permute.xlu0 %858
        %862 = vset.pattern.permute.xlu0 0
        %863 = vperm.xlu0 %862, %v833
        %v864 = vpop.permute.xlu0 %863
        %867 = vset.pattern.permute.xlu0 0
        %868 = vperm.xlu0 %867, %v834
        %v869 = vpop.permute.xlu0 %868
        %872 = vset.pattern.permute.xlu0 0
        %873 = vperm.xlu0 %872, %v835
        %v874 = vpop.permute.xlu0 %873
        %877 = vset.pattern.permute.xlu0 0
        %878 = vperm.xlu0 %877, %v836
        %v879 = vpop.permute.xlu0 %878
        %882 = vset.pattern.permute.xlu0 0
        %883 = vperm.xlu0 %882, %v837
        %v884 = vpop.permute.xlu0 %883
        %887 = vset.pattern.permute.xlu0 0
        %888 = vperm.xlu0 %887, %v838
        %v889 = vpop.permute.xlu0 %888
        %892 = vset.pattern.permute.xlu0 0
        %893 = vperm.xlu0 %892, %v839
        %v894 = vpop.permute.xlu0 %893
        %897 = vset.pattern.permute.xlu0 0
        %898 = vperm.xlu0 %897, %v840
        %v899 = vpop.permute.xlu0 %898
        %902 = vset.pattern.permute.xlu0 0
        %903 = vperm.xlu0 %902, %v841
        %v904 = vpop.permute.xlu0 %903
        %907 = vset.pattern.permute.xlu0 0
        %908 = vperm.xlu0 %907, %v842
        %v909 = vpop.permute.xlu0 %908
        %912 = vset.pattern.permute.xlu0 0
        %913 = vperm.xlu0 %912, %v843
        %v914 = vpop.permute.xlu0 %913
        %917 = vset.pattern.permute.xlu0 0
        %918 = vperm.xlu0 %917, %v844
        %v919 = vpop.permute.xlu0 %918
        %922 = vset.pattern.permute.xlu0 0
        %923 = vperm.xlu0 %922, %v845
        %v924 = vpop.permute.xlu0 %923
        %v926 = vadd.f32 %v702, %v849
        %v927 = vadd.f32 %v703, %v854
        %v928 = vadd.f32 %v704, %v859
        %v929 = vadd.f32 %v705, %v864
        %v930 = vadd.f32 %v706, %v869
        %v931 = vadd.f32 %v707, %v874
        %v932 = vadd.f32 %v708, %v879
        %v933 = vadd.f32 %v709, %v884
        %v934 = vadd.f32 %v710, %v889
        %v935 = vadd.f32 %v711, %v894
        %v936 = vadd.f32 %v712, %v899
        %v937 = vadd.f32 %v713, %v904
        %v938 = vadd.f32 %v714, %v909
        %v939 = vadd.f32 %v715, %v914
        %v940 = vadd.f32 %v716, %v919
        %v941 = vadd.f32 %v717, %v924
        %v942 = vadd.f32 %v718, %v849
        %v943 = vadd.f32 %v719, %v854
        %v944 = vadd.f32 %v720, %v859
        %v945 = vadd.f32 %v721, %v864
        %v946 = vadd.f32 %v722, %v869
        %v947 = vadd.f32 %v723, %v874
        %v948 = vadd.f32 %v724, %v879
        %v949 = vadd.f32 %v725, %v884
        %v950 = vadd.f32 %v726, %v889
        %v951 = vadd.f32 %v727, %v894
        %v952 = vadd.f32 %v728, %v899
        %v953 = vadd.f32 %v729, %v904
        %v954 = vadd.f32 %v730, %v909
        %v955 = vadd.f32 %v731, %v914
        %v956 = vadd.f32 %v732, %v919
        %v957 = vadd.f32 %v733, %v924
        %v958 = vadd.f32 %v734, %v849
        %v959 = vadd.f32 %v735, %v854
        %v960 = vadd.f32 %v736, %v859
        %v961 = vadd.f32 %v737, %v864
        %v962 = vadd.f32 %v738, %v869
        %v963 = vadd.f32 %v739, %v874
        %v964 = vadd.f32 %v740, %v879
        %v965 = vadd.f32 %v741, %v884
        %v966 = vadd.f32 %v742, %v889
        %v967 = vadd.f32 %v743, %v894
        %v968 = vadd.f32 %v744, %v899
        %v969 = vadd.f32 %v745, %v904
        %v970 = vadd.f32 %v746, %v909
        %v971 = vadd.f32 %v747, %v914
        %v972 = vadd.f32 %v748, %v919
        %v973 = vadd.f32 %v749, %v924
        %v974 = vadd.f32 %v750, %v849
        %v975 = vadd.f32 %v751, %v854
        %v976 = vadd.f32 %v752, %v859
        %v977 = vadd.f32 %v753, %v864
        %v978 = vadd.f32 %v754, %v869
        %v979 = vadd.f32 %v755, %v874
        %v980 = vadd.f32 %v756, %v879
        %v981 = vadd.f32 %v757, %v884
        %v982 = vadd.f32 %v758, %v889
        %v983 = vadd.f32 %v759, %v894
        %v984 = vadd.f32 %v760, %v899
        %v985 = vadd.f32 %v761, %v904
        %v986 = vadd.f32 %v762, %v909
        %v987 = vadd.f32 %v763, %v914
        %v988 = vadd.f32 %v764, %v919
        %v989 = vadd.f32 %v765, %v924
        %v990 = vadd.f32 %v766, %v849
        %v991 = vadd.f32 %v767, %v854
        %v992 = vadd.f32 %v768, %v859
        %v993 = vadd.f32 %v769, %v864
        %v994 = vadd.f32 %v770, %v869
        %v995 = vadd.f32 %v771, %v874
        %v996 = vadd.f32 %v772, %v879
        %v997 = vadd.f32 %v773, %v884
        %v998 = vadd.f32 %v774, %v889
        %v999 = vadd.f32 %v775, %v894
        %v1000 = vadd.f32 %v776, %v899
        %v1001 = vadd.f32 %v777, %v904
        %v1002 = vadd.f32 %v778, %v909
        %v1003 = vadd.f32 %v779, %v914
        %v1004 = vadd.f32 %v780, %v919
        %v1005 = vadd.f32 %v781, %v924
        %v1006 = vadd.f32 %v782, %v849
        %v1007 = vadd.f32 %v783, %v854
        %v1008 = vadd.f32 %v784, %v859
        %v1009 = vadd.f32 %v785, %v864
        %v1010 = vadd.f32 %v786, %v869
        %v1011 = vadd.f32 %v787, %v874
        %v1012 = vadd.f32 %v788, %v879
        %v1013 = vadd.f32 %v789, %v884
        %v1014 = vadd.f32 %v790, %v889
        %v1015 = vadd.f32 %v791, %v894
        %v1016 = vadd.f32 %v792, %v899
        %v1017 = vadd.f32 %v793, %v904
        %v1018 = vadd.f32 %v794, %v909
        %v1019 = vadd.f32 %v795, %v914
        %v1020 = vadd.f32 %v796, %v919
        %v1021 = vadd.f32 %v797, %v924
        %v1022 = vadd.f32 %v798, %v849
        %v1023 = vadd.f32 %v799, %v854
        %v1024 = vadd.f32 %v800, %v859
        %v1025 = vadd.f32 %v801, %v864
        %v1026 = vadd.f32 %v802, %v869
        %v1027 = vadd.f32 %v803, %v874
        %v1028 = vadd.f32 %v804, %v879
        %v1029 = vadd.f32 %v805, %v884
        %v1030 = vadd.f32 %v806, %v889
        %v1031 = vadd.f32 %v807, %v894
        %v1032 = vadd.f32 %v808, %v899
        %v1033 = vadd.f32 %v809, %v904
        %v1034 = vadd.f32 %v810, %v909
        %v1035 = vadd.f32 %v811, %v914
        %v1036 = vadd.f32 %v812, %v919
        %v1037 = vadd.f32 %v813, %v924
        %v1038 = vadd.f32 %v814, %v849
        %v1039 = vadd.f32 %v815, %v854
        %v1040 = vadd.f32 %v816, %v859
        %v1041 = vadd.f32 %v817, %v864
        %v1042 = vadd.f32 %v818, %v869
        %v1043 = vadd.f32 %v819, %v874
        %v1044 = vadd.f32 %v820, %v879
        %v1045 = vadd.f32 %v821, %v884
        %v1046 = vadd.f32 %v822, %v889
        %v1047 = vadd.f32 %v823, %v894
        %v1048 = vadd.f32 %v824, %v899
        %v1049 = vadd.f32 %v825, %v904
        %v1050 = vadd.f32 %v826, %v909
        %v1051 = vadd.f32 %v827, %v914
        %v1052 = vadd.f32 %v828, %v919
        %v1053 = vadd.f32 %v829, %v924
        %v1054 = vmax.f32 %v926, 0.0
        %v1055 = vmax.f32 %v927, 0.0
        %v1056 = vmax.f32 %v928, 0.0
        %v1057 = vmax.f32 %v929, 0.0
        %v1058 = vmax.f32 %v930, 0.0
        %v1059 = vmax.f32 %v931, 0.0
        %v1060 = vmax.f32 %v932, 0.0
        %v1061 = vmax.f32 %v933, 0.0
        %v1062 = vmax.f32 %v934, 0.0
        %v1063 = vmax.f32 %v935, 0.0
        %v1064 = vmax.f32 %v936, 0.0
        %v1065 = vmax.f32 %v937, 0.0
        %v1066 = vmax.f32 %v938, 0.0
        %v1067 = vmax.f32 %v939, 0.0
        %v1068 = vmax.f32 %v940, 0.0
        %v1069 = vmax.f32 %v941, 0.0
        %v1070 = vmax.f32 %v942, 0.0
        %v1071 = vmax.f32 %v943, 0.0
        %v1072 = vmax.f32 %v944, 0.0
        %v1073 = vmax.f32 %v945, 0.0
        %v1074 = vmax.f32 %v946, 0.0
        %v1075 = vmax.f32 %v947, 0.0
        %v1076 = vmax.f32 %v948, 0.0
        %v1077 = vmax.f32 %v949, 0.0
        %v1078 = vmax.f32 %v950, 0.0
        %v1079 = vmax.f32 %v951, 0.0
        %v1080 = vmax.f32 %v952, 0.0
        %v1081 = vmax.f32 %v953, 0.0
        %v1082 = vmax.f32 %v954, 0.0
        %v1083 = vmax.f32 %v955, 0.0
        %v1084 = vmax.f32 %v956, 0.0
        %v1085 = vmax.f32 %v957, 0.0
        %v1086 = vmax.f32 %v958, 0.0
        %v1087 = vmax.f32 %v959, 0.0
        %v1088 = vmax.f32 %v960, 0.0
        %v1089 = vmax.f32 %v961, 0.0
        %v1090 = vmax.f32 %v962, 0.0
        %v1091 = vmax.f32 %v963, 0.0
        %v1092 = vmax.f32 %v964, 0.0
        %v1093 = vmax.f32 %v965, 0.0
        %v1094 = vmax.f32 %v966, 0.0
        %v1095 = vmax.f32 %v967, 0.0
        %v1096 = vmax.f32 %v968, 0.0
        %v1097 = vmax.f32 %v969, 0.0
        %v1098 = vmax.f32 %v970, 0.0
        %v1099 = vmax.f32 %v971, 0.0
        %v1100 = vmax.f32 %v972, 0.0
        %v1101 = vmax.f32 %v973, 0.0
        %v1102 = vmax.f32 %v974, 0.0
        %v1103 = vmax.f32 %v975, 0.0
        %v1104 = vmax.f32 %v976, 0.0
        %v1105 = vmax.f32 %v977, 0.0
        %v1106 = vmax.f32 %v978, 0.0
        %v1107 = vmax.f32 %v979, 0.0
        %v1108 = vmax.f32 %v980, 0.0
        %v1109 = vmax.f32 %v981, 0.0
        %v1110 = vmax.f32 %v982, 0.0
        %v1111 = vmax.f32 %v983, 0.0
        %v1112 = vmax.f32 %v984, 0.0
        %v1113 = vmax.f32 %v985, 0.0
        %v1114 = vmax.f32 %v986, 0.0
        %v1115 = vmax.f32 %v987, 0.0
        %v1116 = vmax.f32 %v988, 0.0
        %v1117 = vmax.f32 %v989, 0.0
        %v1118 = vmax.f32 %v990, 0.0
        %v1119 = vmax.f32 %v991, 0.0
        %v1120 = vmax.f32 %v992, 0.0
        %v1121 = vmax.f32 %v993, 0.0
        %v1122 = vmax.f32 %v994, 0.0
        %v1123 = vmax.f32 %v995, 0.0
        %v1124 = vmax.f32 %v996, 0.0
        %v1125 = vmax.f32 %v997, 0.0
        %v1126 = vmax.f32 %v998, 0.0
        %v1127 = vmax.f32 %v999, 0.0
        %v1128 = vmax.f32 %v1000, 0.0
        %v1129 = vmax.f32 %v1001, 0.0
        %v1130 = vmax.f32 %v1002, 0.0
        %v1131 = vmax.f32 %v1003, 0.0
        %v1132 = vmax.f32 %v1004, 0.0
        %v1133 = vmax.f32 %v1005, 0.0
        %v1134 = vmax.f32 %v1006, 0.0
        %v1135 = vmax.f32 %v1007, 0.0
        %v1136 = vmax.f32 %v1008, 0.0
        %v1137 = vmax.f32 %v1009, 0.0
        %v1138 = vmax.f32 %v1010, 0.0
        %v1139 = vmax.f32 %v1011, 0.0
        %v1140 = vmax.f32 %v1012, 0.0
        %v1141 = vmax.f32 %v1013, 0.0
        %v1142 = vmax.f32 %v1014, 0.0
        %v1143 = vmax.f32 %v1015, 0.0
        %v1144 = vmax.f32 %v1016, 0.0
        %v1145 = vmax.f32 %v1017, 0.0
        %v1146 = vmax.f32 %v1018, 0.0
        %v1147 = vmax.f32 %v1019, 0.0
        %v1148 = vmax.f32 %v1020, 0.0
        %v1149 = vmax.f32 %v1021, 0.0
        %v1150 = vmax.f32 %v1022, 0.0
        %v1151 = vmax.f32 %v1023, 0.0
        %v1152 = vmax.f32 %v1024, 0.0
        %v1153 = vmax.f32 %v1025, 0.0
        %v1154 = vmax.f32 %v1026, 0.0
        %v1155 = vmax.f32 %v1027, 0.0
        %v1156 = vmax.f32 %v1028, 0.0
        %v1157 = vmax.f32 %v1029, 0.0
        %v1158 = vmax.f32 %v1030, 0.0
        %v1159 = vmax.f32 %v1031, 0.0
        %v1160 = vmax.f32 %v1032, 0.0
        %v1161 = vmax.f32 %v1033, 0.0
        %v1162 = vmax.f32 %v1034, 0.0
        %v1163 = vmax.f32 %v1035, 0.0
        %v1164 = vmax.f32 %v1036, 0.0
        %v1165 = vmax.f32 %v1037, 0.0
        %v1166 = vmax.f32 %v1038, 0.0
        %v1167 = vmax.f32 %v1039, 0.0
        %v1168 = vmax.f32 %v1040, 0.0
        %v1169 = vmax.f32 %v1041, 0.0
        %v1170 = vmax.f32 %v1042, 0.0
        %v1171 = vmax.f32 %v1043, 0.0
        %v1172 = vmax.f32 %v1044, 0.0
        %v1173 = vmax.f32 %v1045, 0.0
        %v1174 = vmax.f32 %v1046, 0.0
        %v1175 = vmax.f32 %v1047, 0.0
        %v1176 = vmax.f32 %v1048, 0.0
        %v1177 = vmax.f32 %v1049, 0.0
        %v1178 = vmax.f32 %v1050, 0.0
        %v1179 = vmax.f32 %v1051, 0.0
        %v1180 = vmax.f32 %v1052, 0.0
        %v1181 = vmax.f32 %v1053, 0.0
        %v1182 = vld [vmem:[%s9] sm:$0xff]
        %v1183 = vld [vmem:[%s9 + $0x8] sm:$0xff]
        %v1184 = vld [vmem:[%s9 + $0x10] sm:$0xff]
        %v1185 = vld [vmem:[%s9 + $0x18] sm:$0xff]
        %1186 = vmatpush.msra.mxu0 %v1069
        %1187 = vmatpush.msra.mxu0 %v1068
        %1188 = vmatpush.msra.mxu0 %v1067
        %1189 = vmatpush.msra.mxu0 %v1066
        %1190 = vmatpush.msra.mxu0 %v1065
        %1191 = vmatpush.msra.mxu0 %v1064
        %1192 = vmatpush.msra.mxu0 %v1063
        %1193 = vmatpush.msra.mxu0 %v1062
        %1194 = vmatpush.msra.mxu0 %v1061
        %1195 = vmatpush.msra.mxu0 %v1060
        %1196 = vmatpush.msra.mxu0 %v1059
        %1197 = vmatpush.msra.mxu0 %v1058
        %1198 = vmatpush.msra.mxu0 %v1057
        %1199 = vmatpush.msra.mxu0 %v1056
        %1200 = vmatpush.msra.mxu0 %v1055
        %1201 = vmatpush.msra.mxu0 %v1054
        %1202 = vmatmul.f32.gmra.mxu0 %v1182
        %v1203 = vpop.f32.mrf.mxu0
        %v1204 = vadd.f32 0.0, %v1203
        %1205 = vmatmul.f32.gmra.mxu0 %v1183
        %v1206 = vpop.f32.mrf.mxu0
        %v1207 = vadd.f32 0.0, %v1206
        %1208 = vmatmul.f32.gmra.mxu0 %v1184
        %v1209 = vpop.f32.mrf.mxu0
        %v1210 = vadd.f32 0.0, %v1209
        %1211 = vmatmul.f32.gmra.mxu0 %v1185
        %v1212 = vpop.f32.mrf.mxu0
        %v1213 = vadd.f32 0.0, %v1212
        %1214 = vdwg.mxu0
        %1215 = vmatpush.msra.mxu0 %v1085
        %1216 = vmatpush.msra.mxu0 %v1084
        %1217 = vmatpush.msra.mxu0 %v1083
        %1218 = vmatpush.msra.mxu0 %v1082
        %1219 = vmatpush.msra.mxu0 %v1081
        %1220 = vmatpush.msra.mxu0 %v1080
        %1221 = vmatpush.msra.mxu0 %v1079
        %1222 = vmatpush.msra.mxu0 %v1078
        %1223 = vmatpush.msra.mxu0 %v1077
        %1224 = vmatpush.msra.mxu0 %v1076
        %1225 = vmatpush.msra.mxu0 %v1075
        %1226 = vmatpush.msra.mxu0 %v1074
        %1227 = vmatpush.msra.mxu0 %v1073
        %1228 = vmatpush.msra.mxu0 %v1072
        %1229 = vmatpush.msra.mxu0 %v1071
        %1230 = vmatpush.msra.mxu0 %v1070
        %1231 = vmatmul.f32.gmra.mxu0 %v1182
        %v1232 = vpop.f32.mrf.mxu0
        %v1233 = vadd.f32 0.0, %v1232
        %1234 = vmatmul.f32.gmra.mxu0 %v1183
        %v1235 = vpop.f32.mrf.mxu0
        %v1236 = vadd.f32 0.0, %v1235
        %1237 = vmatmul.f32.gmra.mxu0 %v1184
        %v1238 = vpop.f32.mrf.mxu0
        %v1239 = vadd.f32 0.0, %v1238
        %1240 = vmatmul.f32.gmra.mxu0 %v1185
        %v1241 = vpop.f32.mrf.mxu0
        %v1242 = vadd.f32 0.0, %v1241
        %1243 = vdwg.mxu0
        %1244 = vmatpush.msra.mxu0 %v1101
        %1245 = vmatpush.msra.mxu0 %v1100
        %1246 = vmatpush.msra.mxu0 %v1099
        %1247 = vmatpush.msra.mxu0 %v1098
        %1248 = vmatpush.msra.mxu0 %v1097
        %1249 = vmatpush.msra.mxu0 %v1096
        %1250 = vmatpush.msra.mxu0 %v1095
        %1251 = vmatpush.msra.mxu0 %v1094
        %1252 = vmatpush.msra.mxu0 %v1093
        %1253 = vmatpush.msra.mxu0 %v1092
        %1254 = vmatpush.msra.mxu0 %v1091
        %1255 = vmatpush.msra.mxu0 %v1090
        %1256 = vmatpush.msra.mxu0 %v1089
        %1257 = vmatpush.msra.mxu0 %v1088
        %1258 = vmatpush.msra.mxu0 %v1087
        %1259 = vmatpush.msra.mxu0 %v1086
        %1260 = vmatmul.f32.gmra.mxu0 %v1182
        %v1261 = vpop.f32.mrf.mxu0
        %v1262 = vadd.f32 0.0, %v1261
        %1263 = vmatmul.f32.gmra.mxu0 %v1183
        %v1264 = vpop.f32.mrf.mxu0
        %v1265 = vadd.f32 0.0, %v1264
        %1266 = vmatmul.f32.gmra.mxu0 %v1184
        %v1267 = vpop.f32.mrf.mxu0
        %v1268 = vadd.f32 0.0, %v1267
        %1269 = vmatmul.f32.gmra.mxu0 %v1185
        %v1270 = vpop.f32.mrf.mxu0
        %v1271 = vadd.f32 0.0, %v1270
        %1272 = vdwg.mxu0
        %1273 = vmatpush.msra.mxu0 %v1117
        %1274 = vmatpush.msra.mxu0 %v1116
        %1275 = vmatpush.msra.mxu0 %v1115
        %1276 = vmatpush.msra.mxu0 %v1114
        %1277 = vmatpush.msra.mxu0 %v1113
        %1278 = vmatpush.msra.mxu0 %v1112
        %1279 = vmatpush.msra.mxu0 %v1111
        %1280 = vmatpush.msra.mxu0 %v1110
        %1281 = vmatpush.msra.mxu0 %v1109
        %1282 = vmatpush.msra.mxu0 %v1108
        %1283 = vmatpush.msra.mxu0 %v1107
        %1284 = vmatpush.msra.mxu0 %v1106
        %1285 = vmatpush.msra.mxu0 %v1105
        %1286 = vmatpush.msra.mxu0 %v1104
        %1287 = vmatpush.msra.mxu0 %v1103
        %1288 = vmatpush.msra.mxu0 %v1102
        %1289 = vmatmul.f32.gmra.mxu0 %v1182
        %v1290 = vpop.f32.mrf.mxu0
        %v1291 = vadd.f32 0.0, %v1290
        %1292 = vmatmul.f32.gmra.mxu0 %v1183
        %v1293 = vpop.f32.mrf.mxu0
        %v1294 = vadd.f32 0.0, %v1293
        %1295 = vmatmul.f32.gmra.mxu0 %v1184
        %v1296 = vpop.f32.mrf.mxu0
        %v1297 = vadd.f32 0.0, %v1296
        %1298 = vmatmul.f32.gmra.mxu0 %v1185
        %v1299 = vpop.f32.mrf.mxu0
        %v1300 = vadd.f32 0.0, %v1299
        %1301 = vdwg.mxu0
        %1302 = vmatpush.msra.mxu0 %v1133
        %1303 = vmatpush.msra.mxu0 %v1132
        %1304 = vmatpush.msra.mxu0 %v1131
        %1305 = vmatpush.msra.mxu0 %v1130
        %1306 = vmatpush.msra.mxu0 %v1129
        %1307 = vmatpush.msra.mxu0 %v1128
        %1308 = vmatpush.msra.mxu0 %v1127
        %1309 = vmatpush.msra.mxu0 %v1126
        %1310 = vmatpush.msra.mxu0 %v1125
        %1311 = vmatpush.msra.mxu0 %v1124
        %1312 = vmatpush.msra.mxu0 %v1123
        %1313 = vmatpush.msra.mxu0 %v1122
        %1314 = vmatpush.msra.mxu0 %v1121
        %1315 = vmatpush.msra.mxu0 %v1120
        %1316 = vmatpush.msra.mxu0 %v1119
        %1317 = vmatpush.msra.mxu0 %v1118
        %1318 = vmatmul.f32.gmra.mxu0 %v1182
        %v1319 = vpop.f32.mrf.mxu0
        %v1320 = vadd.f32 0.0, %v1319
        %1321 = vmatmul.f32.gmra.mxu0 %v1183
        %v1322 = vpop.f32.mrf.mxu0
        %v1323 = vadd.f32 0.0, %v1322
        %1324 = vmatmul.f32.gmra.mxu0 %v1184
        %v1325 = vpop.f32.mrf.mxu0
        %v1326 = vadd.f32 0.0, %v1325
        %1327 = vmatmul.f32.gmra.mxu0 %v1185
        %v1328 = vpop.f32.mrf.mxu0
        %v1329 = vadd.f32 0.0, %v1328
        %1330 = vdwg.mxu0
        %1331 = vmatpush.msra.mxu0 %v1149
        %1332 = vmatpush.msra.mxu0 %v1148
        %1333 = vmatpush.msra.mxu0 %v1147
        %1334 = vmatpush.msra.mxu0 %v1146
        %1335 = vmatpush.msra.mxu0 %v1145
        %1336 = vmatpush.msra.mxu0 %v1144
        %1337 = vmatpush.msra.mxu0 %v1143
        %1338 = vmatpush.msra.mxu0 %v1142
        %1339 = vmatpush.msra.mxu0 %v1141
        %1340 = vmatpush.msra.mxu0 %v1140
        %1341 = vmatpush.msra.mxu0 %v1139
        %1342 = vmatpush.msra.mxu0 %v1138
        %1343 = vmatpush.msra.mxu0 %v1137
        %1344 = vmatpush.msra.mxu0 %v1136
        %1345 = vmatpush.msra.mxu0 %v1135
        %1346 = vmatpush.msra.mxu0 %v1134
        %1347 = vmatmul.f32.gmra.mxu0 %v1182
        %v1348 = vpop.f32.mrf.mxu0
        %v1349 = vadd.f32 0.0, %v1348
        %1350 = vmatmul.f32.gmra.mxu0 %v1183
        %v1351 = vpop.f32.mrf.mxu0
        %v1352 = vadd.f32 0.0, %v1351
        %1353 = vmatmul.f32.gmra.mxu0 %v1184
        %v1354 = vpop.f32.mrf.mxu0
        %v1355 = vadd.f32 0.0, %v1354
        %1356 = vmatmul.f32.gmra.mxu0 %v1185
        %v1357 = vpop.f32.mrf.mxu0
        %v1358 = vadd.f32 0.0, %v1357
        %1359 = vdwg.mxu0
        %1360 = vmatpush.msra.mxu0 %v1165
        %1361 = vmatpush.msra.mxu0 %v1164
        %1362 = vmatpush.msra.mxu0 %v1163
        %1363 = vmatpush.msra.mxu0 %v1162
        %1364 = vmatpush.msra.mxu0 %v1161
        %1365 = vmatpush.msra.mxu0 %v1160
        %1366 = vmatpush.msra.mxu0 %v1159
        %1367 = vmatpush.msra.mxu0 %v1158
        %1368 = vmatpush.msra.mxu0 %v1157
        %1369 = vmatpush.msra.mxu0 %v1156
        %1370 = vmatpush.msra.mxu0 %v1155
        %1371 = vmatpush.msra.mxu0 %v1154
        %1372 = vmatpush.msra.mxu0 %v1153
        %1373 = vmatpush.msra.mxu0 %v1152
        %1374 = vmatpush.msra.mxu0 %v1151
        %1375 = vmatpush.msra.mxu0 %v1150
        %1376 = vmatmul.f32.gmra.mxu0 %v1182
        %v1377 = vpop.f32.mrf.mxu0
        %v1378 = vadd.f32 0.0, %v1377
        %1379 = vmatmul.f32.gmra.mxu0 %v1183
        %v1380 = vpop.f32.mrf.mxu0
        %v1381 = vadd.f32 0.0, %v1380
        %1382 = vmatmul.f32.gmra.mxu0 %v1184
        %v1383 = vpop.f32.mrf.mxu0
        %v1384 = vadd.f32 0.0, %v1383
        %1385 = vmatmul.f32.gmra.mxu0 %v1185
        %v1386 = vpop.f32.mrf.mxu0
        %v1387 = vadd.f32 0.0, %v1386
        %1388 = vdwg.mxu0
        %1389 = vmatpush.msra.mxu0 %v1181
        %1390 = vmatpush.msra.mxu0 %v1180
        %1391 = vmatpush.msra.mxu0 %v1179
        %1392 = vmatpush.msra.mxu0 %v1178
        %1393 = vmatpush.msra.mxu0 %v1177
        %1394 = vmatpush.msra.mxu0 %v1176
        %1395 = vmatpush.msra.mxu0 %v1175
        %1396 = vmatpush.msra.mxu0 %v1174
        %1397 = vmatpush.msra.mxu0 %v1173
        %1398 = vmatpush.msra.mxu0 %v1172
        %1399 = vmatpush.msra.mxu0 %v1171
        %1400 = vmatpush.msra.mxu0 %v1170
        %1401 = vmatpush.msra.mxu0 %v1169
        %1402 = vmatpush.msra.mxu0 %v1168
        %1403 = vmatpush.msra.mxu0 %v1167
        %1404 = vmatpush.msra.mxu0 %v1166
        %1405 = vmatmul.f32.gmra.mxu0 %v1182
        %v1406 = vpop.f32.mrf.mxu0
        %v1407 = vadd.f32 0.0, %v1406
        %1408 = vmatmul.f32.gmra.mxu0 %v1183
        %v1409 = vpop.f32.mrf.mxu0
        %v1410 = vadd.f32 0.0, %v1409
        %1411 = vmatmul.f32.gmra.mxu0 %v1184
        %v1412 = vpop.f32.mrf.mxu0
        %v1413 = vadd.f32 0.0, %v1412
        %1414 = vmatmul.f32.gmra.mxu0 %v1185
        %v1415 = vpop.f32.mrf.mxu0
        %v1416 = vadd.f32 0.0, %v1415
        %1417 = vdwg.mxu0
        %v1418 = vld [vmem:[%s10] sm:$0x1]
        %v1420 = vperm.slane %v1418, 0
        %v1422 = vadd.f32 %v534, %v1420
        %v1423 = vperm.slane %v1422, 0
        %v1424 = vlaneseq
        %v1425 = vshrl.u32 %v1424, 7
        %1427 = vset.pattern.permute.xlu0 %v1425
        %1428 = vperm.xlu0 %1427, %v1423
        %v1429 = vpop.permute.xlu0 %1428
        %v1430 = vlaneseq
        %v1431 = vshrl.u32 %v1430, 7
        %v1432 = vadd.s32 %v1431, 8
        %1433 = vset.pattern.permute.xlu0 %v1432
        %1434 = vperm.xlu0 %1433, %v1423
        %v1435 = vpop.permute.xlu0 %1434
        %v1436 = vlaneseq
        %v1437 = vshrl.u32 %v1436, 7
        %v1438 = vadd.s32 %v1437, 16
        %1439 = vset.pattern.permute.xlu0 %v1438
        %1440 = vperm.xlu0 %1439, %v1423
        %v1441 = vpop.permute.xlu0 %1440
        %v1442 = vlaneseq
        %v1443 = vshrl.u32 %v1442, 7
        %v1444 = vadd.s32 %v1443, 24
        %1445 = vset.pattern.permute.xlu0 %v1444
        %1446 = vperm.xlu0 %1445, %v1423
        %v1447 = vpop.permute.xlu0 %1446
        %v1448 = vperm.slane %v1422, 1
        %v1449 = vlaneseq
        %v1450 = vshrl.u32 %v1449, 7
        %1452 = vset.pattern.permute.xlu0 %v1450
        %1453 = vperm.xlu0 %1452, %v1448
        %v1454 = vpop.permute.xlu0 %1453
        %v1455 = vlaneseq
        %v1456 = vshrl.u32 %v1455, 7
        %v1457 = vadd.s32 %v1456, 8
        %1458 = vset.pattern.permute.xlu0 %v1457
        %1459 = vperm.xlu0 %1458, %v1448
        %v1460 = vpop.permute.xlu0 %1459
        %v1461 = vlaneseq
        %v1462 = vshrl.u32 %v1461, 7
        %v1463 = vadd.s32 %v1462, 16
        %1464 = vset.pattern.permute.xlu0 %v1463
        %1465 = vperm.xlu0 %1464, %v1448
        %v1466 = vpop.permute.xlu0 %1465
        %v1467 = vlaneseq
        %v1468 = vshrl.u32 %v1467, 7
        %v1469 = vadd.s32 %v1468, 24
        %1470 = vset.pattern.permute.xlu0 %v1469
        %1471 = vperm.xlu0 %1470, %v1448
        %v1472 = vpop.permute.xlu0 %1471
        %v1473 = vperm.slane %v1422, 2
        %v1474 = vlaneseq
        %v1475 = vshrl.u32 %v1474, 7
        %1477 = vset.pattern.permute.xlu0 %v1475
        %1478 = vperm.xlu0 %1477, %v1473
        %v1479 = vpop.permute.xlu0 %1478
        %v1480 = vlaneseq
        %v1481 = vshrl.u32 %v1480, 7
        %v1482 = vadd.s32 %v1481, 8
        %1483 = vset.pattern.permute.xlu0 %v1482
        %1484 = vperm.xlu0 %1483, %v1473
        %v1485 = vpop.permute.xlu0 %1484
        %v1486 = vlaneseq
        %v1487 = vshrl.u32 %v1486, 7
        %v1488 = vadd.s32 %v1487, 16
        %1489 = vset.pattern.permute.xlu0 %v1488
        %1490 = vperm.xlu0 %1489, %v1473
        %v1491 = vpop.permute.xlu0 %1490
        %v1492 = vlaneseq
        %v1493 = vshrl.u32 %v1492, 7
        %v1494 = vadd.s32 %v1493, 24
        %1495 = vset.pattern.permute.xlu0 %v1494
        %1496 = vperm.xlu0 %1495, %v1473
        %v1497 = vpop.permute.xlu0 %1496
        %v1498 = vperm.slane %v1422, 3
        %v1499 = vlaneseq
        %v1500 = vshrl.u32 %v1499, 7
        %1502 = vset.pattern.permute.xlu0 %v1500
        %1503 = vperm.xlu0 %1502, %v1498
        %v1504 = vpop.permute.xlu0 %1503
        %v1505 = vlaneseq
        %v1506 = vshrl.u32 %v1505, 7
        %v1507 = vadd.s32 %v1506, 8
        %1508 = vset.pattern.permute.xlu0 %v1507
        %1509 = vperm.xlu0 %1508, %v1498
        %v1510 = vpop.permute.xlu0 %1509
        %v1511 = vlaneseq
        %v1512 = vshrl.u32 %v1511, 7
        %v1513 = vadd.s32 %v1512, 16
        %1514 = vset.pattern.permute.xlu0 %v1513
        %1515 = vperm.xlu0 %1514, %v1498
        %v1516 = vpop.permute.xlu0 %1515
        %v1517 = vlaneseq
        %v1518 = vshrl.u32 %v1517, 7
        %v1519 = vadd.s32 %v1518, 24
        %1520 = vset.pattern.permute.xlu0 %v1519
        %1521 = vperm.xlu0 %1520, %v1498
        %v1522 = vpop.permute.xlu0 %1521
        %v1523 = vperm.slane %v1422, 4
        %v1524 = vlaneseq
        %v1525 = vshrl.u32 %v1524, 7
        %1527 = vset.pattern.permute.xlu0 %v1525
        %1528 = vperm.xlu0 %1527, %v1523
        %v1529 = vpop.permute.xlu0 %1528
        %v1530 = vlaneseq
        %v1531 = vshrl.u32 %v1530, 7
        %v1532 = vadd.s32 %v1531, 8
        %1533 = vset.pattern.permute.xlu0 %v1532
        %1534 = vperm.xlu0 %1533, %v1523
        %v1535 = vpop.permute.xlu0 %1534
        %v1536 = vlaneseq
        %v1537 = vshrl.u32 %v1536, 7
        %v1538 = vadd.s32 %v1537, 16
        %1539 = vset.pattern.permute.xlu0 %v1538
        %1540 = vperm.xlu0 %1539, %v1523
        %v1541 = vpop.permute.xlu0 %1540
        %v1542 = vlaneseq
        %v1543 = vshrl.u32 %v1542, 7
        %v1544 = vadd.s32 %v1543, 24
        %1545 = vset.pattern.permute.xlu0 %v1544
        %1546 = vperm.xlu0 %1545, %v1523
        %v1547 = vpop.permute.xlu0 %1546
        %v1548 = vperm.slane %v1422, 5
        %v1549 = vlaneseq
        %v1550 = vshrl.u32 %v1549, 7
        %1552 = vset.pattern.permute.xlu0 %v1550
        %1553 = vperm.xlu0 %1552, %v1548
        %v1554 = vpop.permute.xlu0 %1553
        %v1555 = vlaneseq
        %v1556 = vshrl.u32 %v1555, 7
        %v1557 = vadd.s32 %v1556, 8
        %1558 = vset.pattern.permute.xlu0 %v1557
        %1559 = vperm.xlu0 %1558, %v1548
        %v1560 = vpop.permute.xlu0 %1559
        %v1561 = vlaneseq
        %v1562 = vshrl.u32 %v1561, 7
        %v1563 = vadd.s32 %v1562, 16
        %1564 = vset.pattern.permute.xlu0 %v1563
        %1565 = vperm.xlu0 %1564, %v1548
        %v1566 = vpop.permute.xlu0 %1565
        %v1567 = vlaneseq
        %v1568 = vshrl.u32 %v1567, 7
        %v1569 = vadd.s32 %v1568, 24
        %1570 = vset.pattern.permute.xlu0 %v1569
        %1571 = vperm.xlu0 %1570, %v1548
        %v1572 = vpop.permute.xlu0 %1571
        %v1573 = vperm.slane %v1422, 6
        %v1574 = vlaneseq
        %v1575 = vshrl.u32 %v1574, 7
        %1577 = vset.pattern.permute.xlu0 %v1575
        %1578 = vperm.xlu0 %1577, %v1573
        %v1579 = vpop.permute.xlu0 %1578
        %v1580 = vlaneseq
        %v1581 = vshrl.u32 %v1580, 7
        %v1582 = vadd.s32 %v1581, 8
        %1583 = vset.pattern.permute.xlu0 %v1582
        %1584 = vperm.xlu0 %1583, %v1573
        %v1585 = vpop.permute.xlu0 %1584
        %v1586 = vlaneseq
        %v1587 = vshrl.u32 %v1586, 7
        %v1588 = vadd.s32 %v1587, 16
        %1589 = vset.pattern.permute.xlu0 %v1588
        %1590 = vperm.xlu0 %1589, %v1573
        %v1591 = vpop.permute.xlu0 %1590
        %v1592 = vlaneseq
        %v1593 = vshrl.u32 %v1592, 7
        %v1594 = vadd.s32 %v1593, 24
        %1595 = vset.pattern.permute.xlu0 %v1594
        %1596 = vperm.xlu0 %1595, %v1573
        %v1597 = vpop.permute.xlu0 %1596
        %v1598 = vperm.slane %v1422, 7
        %v1599 = vlaneseq
        %v1600 = vshrl.u32 %v1599, 7
        %1602 = vset.pattern.permute.xlu0 %v1600
        %1603 = vperm.xlu0 %1602, %v1598
        %v1604 = vpop.permute.xlu0 %1603
        %v1605 = vlaneseq
        %v1606 = vshrl.u32 %v1605, 7
        %v1607 = vadd.s32 %v1606, 8
        %1608 = vset.pattern.permute.xlu0 %v1607
        %1609 = vperm.xlu0 %1608, %v1598
        %v1610 = vpop.permute.xlu0 %1609
        %v1611 = vlaneseq
        %v1612 = vshrl.u32 %v1611, 7
        %v1613 = vadd.s32 %v1612, 16
        %1614 = vset.pattern.permute.xlu0 %v1613
        %1615 = vperm.xlu0 %1614, %v1598
        %v1616 = vpop.permute.xlu0 %1615
        %v1617 = vlaneseq
        %v1618 = vshrl.u32 %v1617, 7
        %v1619 = vadd.s32 %v1618, 24
        %1620 = vset.pattern.permute.xlu0 %v1619
        %1621 = vperm.xlu0 %1620, %v1598
        %v1622 = vpop.permute.xlu0 %1621
        %v1623 = vadd.f32 %v1429, %v1204
        %v1624 = vadd.f32 %v1435, %v1207
        %v1625 = vadd.f32 %v1441, %v1210
        %v1626 = vadd.f32 %v1447, %v1213
        %v1627 = vadd.f32 %v1454, %v1233
        %v1628 = vadd.f32 %v1460, %v1236
        %v1629 = vadd.f32 %v1466, %v1239
        %v1630 = vadd.f32 %v1472, %v1242
        %v1631 = vadd.f32 %v1479, %v1262
        %v1632 = vadd.f32 %v1485, %v1265
        %v1633 = vadd.f32 %v1491, %v1268
        %v1634 = vadd.f32 %v1497, %v1271
        %v1635 = vadd.f32 %v1504, %v1291
        %v1636 = vadd.f32 %v1510, %v1294
        %v1637 = vadd.f32 %v1516, %v1297
        %v1638 = vadd.f32 %v1522, %v1300
        %v1639 = vadd.f32 %v1529, %v1320
        %v1640 = vadd.f32 %v1535, %v1323
        %v1641 = vadd.f32 %v1541, %v1326
        %v1642 = vadd.f32 %v1547, %v1329
        %v1643 = vadd.f32 %v1554, %v1349
        %v1644 = vadd.f32 %v1560, %v1352
        %v1645 = vadd.f32 %v1566, %v1355
        %v1646 = vadd.f32 %v1572, %v1358
        %v1647 = vadd.f32 %v1579, %v1378
        %v1648 = vadd.f32 %v1585, %v1381
        %v1649 = vadd.f32 %v1591, %v1384
        %v1650 = vadd.f32 %v1597, %v1387
        %v1651 = vadd.f32 %v1604, %v1407
        %v1652 = vadd.f32 %v1610, %v1410
        %v1653 = vadd.f32 %v1616, %v1413
        %v1654 = vadd.f32 %v1622, %v1416
        %v1655 = vmul.f32 %v1623, %v535
        %v1656 = vmul.f32 %v1624, %v536
        %v1657 = vmul.f32 %v1625, %v537
        %v1658 = vmul.f32 %v1626, %v538
        %v1659 = vmul.f32 %v1627, %v535
        %v1660 = vmul.f32 %v1628, %v536
        %v1661 = vmul.f32 %v1629, %v537
        %v1662 = vmul.f32 %v1630, %v538
        %v1663 = vmul.f32 %v1631, %v535
        %v1664 = vmul.f32 %v1632, %v536
        %v1665 = vmul.f32 %v1633, %v537
        %v1666 = vmul.f32 %v1634, %v538
        %v1667 = vmul.f32 %v1635, %v535
        %v1668 = vmul.f32 %v1636, %v536
        %v1669 = vmul.f32 %v1637, %v537
        %v1670 = vmul.f32 %v1638, %v538
        %v1671 = vmul.f32 %v1639, %v535
        %v1672 = vmul.f32 %v1640, %v536
        %v1673 = vmul.f32 %v1641, %v537
        %v1674 = vmul.f32 %v1642, %v538
        %v1675 = vmul.f32 %v1643, %v535
        %v1676 = vmul.f32 %v1644, %v536
        %v1677 = vmul.f32 %v1645, %v537
        %v1678 = vmul.f32 %v1646, %v538
        %v1679 = vmul.f32 %v1647, %v535
        %v1680 = vmul.f32 %v1648, %v536
        %v1681 = vmul.f32 %v1649, %v537
        %v1682 = vmul.f32 %v1650, %v538
        %v1683 = vmul.f32 %v1651, %v535
        %v1684 = vmul.f32 %v1652, %v536
        %v1685 = vmul.f32 %v1653, %v537
        %v1686 = vmul.f32 %v1654, %v538
        %v1687 = vmul.f32 %v569, -1.0
        %v1688 = vmul.f32 %v1687, 1.442695
        %v1689 = vpow.pop %v1688
        %v1691 = vrot.slane %v1689, 1
        %v1692 = vrot.slane %v1689, 2
        %v1693 = vrot.slane %v1689, 3
        %v1694 = vrot.slane %v1689, 4
        %v1695 = vrot.slane %v1689, 5
        %v1696 = vrot.slane %v1689, 6
        %v1697 = vrot.slane %v1689, 7
        %v1698 = vperm.slane %v1689, 0
        %v1699 = vperm.slane %v1691, 0
        %v1700 = vperm.slane %v1692, 0
        %v1701 = vperm.slane %v1693, 0
        %v1702 = vperm.slane %v1694, 0
        %v1703 = vperm.slane %v1695, 0
        %v1704 = vperm.slane %v1696, 0
        %v1705 = vperm.slane %v1697, 0
        %v1714 = vmul.f32 %v1698, %v1655
        %v1715 = vmul.f32 %v1698, %v1656
        %v1716 = vmul.f32 %v1698, %v1657
        %v1717 = vmul.f32 %v1698, %v1658
        %v1718 = vmul.f32 %v1699, %v1659
        %v1719 = vmul.f32 %v1699, %v1660
        %v1720 = vmul.f32 %v1699, %v1661
        %v1721 = vmul.f32 %v1699, %v1662
        %v1722 = vmul.f32 %v1700, %v1663
        %v1723 = vmul.f32 %v1700, %v1664
        %v1724 = vmul.f32 %v1700, %v1665
        %v1725 = vmul.f32 %v1700, %v1666
        %v1726 = vmul.f32 %v1701, %v1667
        %v1727 = vmul.f32 %v1701, %v1668
        %v1728 = vmul.f32 %v1701, %v1669
        %v1729 = vmul.f32 %v1701, %v1670
        %v1730 = vmul.f32 %v1702, %v1671
        %v1731 = vmul.f32 %v1702, %v1672
        %v1732 = vmul.f32 %v1702, %v1673
        %v1733 = vmul.f32 %v1702, %v1674
        %v1734 = vmul.f32 %v1703, %v1675
        %v1735 = vmul.f32 %v1703, %v1676
        %v1736 = vmul.f32 %v1703, %v1677
        %v1737 = vmul.f32 %v1703, %v1678
        %v1738 = vmul.f32 %v1704, %v1679
        %v1739 = vmul.f32 %v1704, %v1680
        %v1740 = vmul.f32 %v1704, %v1681
        %v1741 = vmul.f32 %v1704, %v1682
        %v1742 = vmul.f32 %v1705, %v1683
        %v1743 = vmul.f32 %v1705, %v1684
        %v1744 = vmul.f32 %v1705, %v1685
        %v1745 = vmul.f32 %v1705, %v1686
        %v1746 = vld [vmem:[%s530] sm:$0xff]
        %v1747 = vld [vmem:[%s533] sm:$0x1]
        %1749 = vset.pattern.permute.xlu0 0
        %1750 = vperm.xlu0 %1749, %v1746
        %v1751 = vpop.permute.xlu0 %1750
        %v1754 = vperm.slane %v1747, 0
        %v1756 = vmul.f32 %v1751, %v1754
        %vm1757 = vcmp.gt.f32.partialorder %v1756, 0.0
        %v1758 = vsel %vm1757, 1, 0
        %v1759 = vrot.slane %v1758, 1
        %v1760 = vrot.slane %v1758, 2
        %v1761 = vrot.slane %v1758, 3
        %v1762 = vrot.slane %v1758, 4
        %v1763 = vrot.slane %v1758, 5
        %v1764 = vrot.slane %v1758, 6
        %v1765 = vrot.slane %v1758, 7
        %vm1766 = vcmp.ne.s32.totalorder %v1759, 0
        %vm1767 = vcmp.ne.s32.totalorder %v1760, 0
        %vm1768 = vcmp.ne.s32.totalorder %v1761, 0
        %vm1769 = vcmp.ne.s32.totalorder %v1762, 0
        %vm1770 = vcmp.ne.s32.totalorder %v1763, 0
        %vm1771 = vcmp.ne.s32.totalorder %v1764, 0
        %vm1772 = vcmp.ne.s32.totalorder %v1765, 0
        %v1773 = vsel %vm1766, 1, 0
        %v1774 = vsel %vm1767, 1, 0
        %v1775 = vsel %vm1768, 1, 0
        %v1776 = vsel %vm1769, 1, 0
        %v1777 = vsel %vm1770, 1, 0
        %v1778 = vsel %vm1771, 1, 0
        %v1779 = vsel %vm1772, 1, 0
        %v1780 = vperm.slane %v1758, 0
        %v1781 = vperm.slane %v1773, 0
        %v1782 = vperm.slane %v1774, 0
        %v1783 = vperm.slane %v1775, 0
        %v1784 = vperm.slane %v1776, 0
        %v1785 = vperm.slane %v1777, 0
        %v1786 = vperm.slane %v1778, 0
        %v1787 = vperm.slane %v1779, 0
        %vm1788 = vcmp.eq.s32.totalorder %v1780, 1
        %vm1789 = vcmp.eq.s32.totalorder %v1781, 1
        %vm1790 = vcmp.eq.s32.totalorder %v1782, 1
        %vm1791 = vcmp.eq.s32.totalorder %v1783, 1
        %vm1792 = vcmp.eq.s32.totalorder %v1784, 1
        %vm1793 = vcmp.eq.s32.totalorder %v1785, 1
        %vm1794 = vcmp.eq.s32.totalorder %v1786, 1
        %vm1795 = vcmp.eq.s32.totalorder %v1787, 1
        %v1796 = vsel %vm1788, -1e+30, %v1714
        %v1797 = vsel %vm1788, -1e+30, %v1715
        %v1798 = vsel %vm1788, -1e+30, %v1716
        %v1799 = vsel %vm1788, -1e+30, %v1717
        %v1800 = vsel %vm1789, -1e+30, %v1718
        %v1801 = vsel %vm1789, -1e+30, %v1719
        %v1802 = vsel %vm1789, -1e+30, %v1720
        %v1803 = vsel %vm1789, -1e+30, %v1721
        %v1804 = vsel %vm1790, -1e+30, %v1722
        %v1805 = vsel %vm1790, -1e+30, %v1723
        %v1806 = vsel %vm1790, -1e+30, %v1724
        %v1807 = vsel %vm1790, -1e+30, %v1725
        %v1808 = vsel %vm1791, -1e+30, %v1726
        %v1809 = vsel %vm1791, -1e+30, %v1727
        %v1810 = vsel %vm1791, -1e+30, %v1728
        %v1811 = vsel %vm1791, -1e+30, %v1729
        %v1812 = vsel %vm1792, -1e+30, %v1730
        %v1813 = vsel %vm1792, -1e+30, %v1731
        %v1814 = vsel %vm1792, -1e+30, %v1732
        %v1815 = vsel %vm1792, -1e+30, %v1733
        %v1816 = vsel %vm1793, -1e+30, %v1734
        %v1817 = vsel %vm1793, -1e+30, %v1735
        %v1818 = vsel %vm1793, -1e+30, %v1736
        %v1819 = vsel %vm1793, -1e+30, %v1737
        %v1820 = vsel %vm1794, -1e+30, %v1738
        %v1821 = vsel %vm1794, -1e+30, %v1739
        %v1822 = vsel %vm1794, -1e+30, %v1740
        %v1823 = vsel %vm1794, -1e+30, %v1741
        %v1824 = vsel %vm1795, -1e+30, %v1742
        %v1825 = vsel %vm1795, -1e+30, %v1743
        %v1826 = vsel %vm1795, -1e+30, %v1744
        %v1827 = vsel %vm1795, -1e+30, %v1745
        %vm1828 = vcmask 64512
        %v1829 = vsel %vm1828, %v1796, -inf
        %1830 = vmax.xlane.f32.xlu0 %v1829
        %v1831 = vpop.xlane.xlu0 %1830
        %v1832 = vsel %vm1828, %v1797, -inf
        %1833 = vmax.xlane.f32.xlu0 %v1832
        %v1834 = vpop.xlane.xlu0 %1833
        %v1835 = vsel %vm1828, %v1798, -inf
        %1836 = vmax.xlane.f32.xlu0 %v1835
        %v1837 = vpop.xlane.xlu0 %1836
        %v1838 = vsel %vm1828, %v1799, -inf
        %1839 = vmax.xlane.f32.xlu0 %v1838
        %v1840 = vpop.xlane.xlu0 %1839
        %v1841 = vsel %vm1828, %v1800, -inf
        %1842 = vmax.xlane.f32.xlu0 %v1841
        %v1843 = vpop.xlane.xlu0 %1842
        %v1844 = vsel %vm1828, %v1801, -inf
        %1845 = vmax.xlane.f32.xlu0 %v1844
        %v1846 = vpop.xlane.xlu0 %1845
        %v1847 = vsel %vm1828, %v1802, -inf
        %1848 = vmax.xlane.f32.xlu0 %v1847
        %v1849 = vpop.xlane.xlu0 %1848
        %v1850 = vsel %vm1828, %v1803, -inf
        %1851 = vmax.xlane.f32.xlu0 %v1850
        %v1852 = vpop.xlane.xlu0 %1851
        %v1853 = vsel %vm1828, %v1804, -inf
        %1854 = vmax.xlane.f32.xlu0 %v1853
        %v1855 = vpop.xlane.xlu0 %1854
        %v1856 = vsel %vm1828, %v1805, -inf
        %1857 = vmax.xlane.f32.xlu0 %v1856
        %v1858 = vpop.xlane.xlu0 %1857
        %v1859 = vsel %vm1828, %v1806, -inf
        %1860 = vmax.xlane.f32.xlu0 %v1859
        %v1861 = vpop.xlane.xlu0 %1860
        %v1862 = vsel %vm1828, %v1807, -inf
        %1863 = vmax.xlane.f32.xlu0 %v1862
        %v1864 = vpop.xlane.xlu0 %1863
        %v1865 = vsel %vm1828, %v1808, -inf
        %1866 = vmax.xlane.f32.xlu0 %v1865
        %v1867 = vpop.xlane.xlu0 %1866
        %v1868 = vsel %vm1828, %v1809, -inf
        %1869 = vmax.xlane.f32.xlu0 %v1868
        %v1870 = vpop.xlane.xlu0 %1869
        %v1871 = vsel %vm1828, %v1810, -inf
        %1872 = vmax.xlane.f32.xlu0 %v1871
        %v1873 = vpop.xlane.xlu0 %1872
        %v1874 = vsel %vm1828, %v1811, -inf
        %1875 = vmax.xlane.f32.xlu0 %v1874
        %v1876 = vpop.xlane.xlu0 %1875
        %v1877 = vsel %vm1828, %v1812, -inf
        %1878 = vmax.xlane.f32.xlu0 %v1877
        %v1879 = vpop.xlane.xlu0 %1878
        %v1880 = vsel %vm1828, %v1813, -inf
        %1881 = vmax.xlane.f32.xlu0 %v1880
        %v1882 = vpop.xlane.xlu0 %1881
        %v1883 = vsel %vm1828, %v1814, -inf
        %1884 = vmax.xlane.f32.xlu0 %v1883
        %v1885 = vpop.xlane.xlu0 %1884
        %v1886 = vsel %vm1828, %v1815, -inf
        %1887 = vmax.xlane.f32.xlu0 %v1886
        %v1888 = vpop.xlane.xlu0 %1887
        %v1889 = vsel %vm1828, %v1816, -inf
        %1890 = vmax.xlane.f32.xlu0 %v1889
        %v1891 = vpop.xlane.xlu0 %1890
        %v1892 = vsel %vm1828, %v1817, -inf
        %1893 = vmax.xlane.f32.xlu0 %v1892
        %v1894 = vpop.xlane.xlu0 %1893
        %v1895 = vsel %vm1828, %v1818, -inf
        %1896 = vmax.xlane.f32.xlu0 %v1895
        %v1897 = vpop.xlane.xlu0 %1896
        %v1898 = vsel %vm1828, %v1819, -inf
        %1899 = vmax.xlane.f32.xlu0 %v1898
        %v1900 = vpop.xlane.xlu0 %1899
        %v1901 = vsel %vm1828, %v1820, -inf
        %1902 = vmax.xlane.f32.xlu0 %v1901
        %v1903 = vpop.xlane.xlu0 %1902
        %v1904 = vsel %vm1828, %v1821, -inf
        %1905 = vmax.xlane.f32.xlu0 %v1904
        %v1906 = vpop.xlane.xlu0 %1905
        %v1907 = vsel %vm1828, %v1822, -inf
        %1908 = vmax.xlane.f32.xlu0 %v1907
        %v1909 = vpop.xlane.xlu0 %1908
        %v1910 = vsel %vm1828, %v1823, -inf
        %1911 = vmax.xlane.f32.xlu0 %v1910
        %v1912 = vpop.xlane.xlu0 %1911
        %v1913 = vsel %vm1828, %v1824, -inf
        %1914 = vmax.xlane.f32.xlu0 %v1913
        %v1915 = vpop.xlane.xlu0 %1914
        %v1916 = vsel %vm1828, %v1825, -inf
        %1917 = vmax.xlane.f32.xlu0 %v1916
        %v1918 = vpop.xlane.xlu0 %1917
        %v1919 = vsel %vm1828, %v1826, -inf
        %1920 = vmax.xlane.f32.xlu0 %v1919
        %v1921 = vpop.xlane.xlu0 %1920
        %v1922 = vsel %vm1828, %v1827, -inf
        %1923 = vmax.xlane.f32.xlu0 %v1922
        %v1924 = vpop.xlane.xlu0 %1923
        %v1925 = vsub.f32 %v1796, %v1831
        %v1926 = vsub.f32 %v1797, %v1834
        %v1927 = vsub.f32 %v1798, %v1837
        %v1928 = vsub.f32 %v1799, %v1840
        %v1929 = vsub.f32 %v1800, %v1843
        %v1930 = vsub.f32 %v1801, %v1846
        %v1931 = vsub.f32 %v1802, %v1849
        %v1932 = vsub.f32 %v1803, %v1852
        %v1933 = vsub.f32 %v1804, %v1855
        %v1934 = vsub.f32 %v1805, %v1858
        %v1935 = vsub.f32 %v1806, %v1861
        %v1936 = vsub.f32 %v1807, %v1864
        %v1937 = vsub.f32 %v1808, %v1867
        %v1938 = vsub.f32 %v1809, %v1870
        %v1939 = vsub.f32 %v1810, %v1873
        %v1940 = vsub.f32 %v1811, %v1876
        %v1941 = vsub.f32 %v1812, %v1879
        %v1942 = vsub.f32 %v1813, %v1882
        %v1943 = vsub.f32 %v1814, %v1885
        %v1944 = vsub.f32 %v1815, %v1888
        %v1945 = vsub.f32 %v1816, %v1891
        %v1946 = vsub.f32 %v1817, %v1894
        %v1947 = vsub.f32 %v1818, %v1897
        %v1948 = vsub.f32 %v1819, %v1900
        %v1949 = vsub.f32 %v1820, %v1903
        %v1950 = vsub.f32 %v1821, %v1906
        %v1951 = vsub.f32 %v1822, %v1909
        %v1952 = vsub.f32 %v1823, %v1912
        %v1953 = vsub.f32 %v1824, %v1915
        %v1954 = vsub.f32 %v1825, %v1918
        %v1955 = vsub.f32 %v1826, %v1921
        %v1956 = vsub.f32 %v1827, %v1924
        %v1957 = vmul.f32 %v1925, 1.442695
        %v1958 = vpow.pop %v1957
        %v1959 = vmul.f32 %v1926, 1.442695
        %v1960 = vpow.pop %v1959
        %v1961 = vmul.f32 %v1927, 1.442695
        %v1962 = vpow.pop %v1961
        %v1963 = vmul.f32 %v1928, 1.442695
        %v1964 = vpow.pop %v1963
        %v1965 = vmul.f32 %v1929, 1.442695
        %v1966 = vpow.pop %v1965
        %v1967 = vmul.f32 %v1930, 1.442695
        %v1968 = vpow.pop %v1967
        %v1969 = vmul.f32 %v1931, 1.442695
        %v1970 = vpow.pop %v1969
        %v1971 = vmul.f32 %v1932, 1.442695
        %v1972 = vpow.pop %v1971
        %v1973 = vmul.f32 %v1933, 1.442695
        %v1974 = vpow.pop %v1973
        %v1975 = vmul.f32 %v1934, 1.442695
        %v1976 = vpow.pop %v1975
        %v1977 = vmul.f32 %v1935, 1.442695
        %v1978 = vpow.pop %v1977
        %v1979 = vmul.f32 %v1936, 1.442695
        %v1980 = vpow.pop %v1979
        %v1981 = vmul.f32 %v1937, 1.442695
        %v1982 = vpow.pop %v1981
        %v1983 = vmul.f32 %v1938, 1.442695
        %v1984 = vpow.pop %v1983
        %v1985 = vmul.f32 %v1939, 1.442695
        %v1986 = vpow.pop %v1985
        %v1987 = vmul.f32 %v1940, 1.442695
        %v1988 = vpow.pop %v1987
        %v1989 = vmul.f32 %v1941, 1.442695
        %v1990 = vpow.pop %v1989
        %v1991 = vmul.f32 %v1942, 1.442695
        %v1992 = vpow.pop %v1991
        %v1993 = vmul.f32 %v1943, 1.442695
        %v1994 = vpow.pop %v1993
        %v1995 = vmul.f32 %v1944, 1.442695
        %v1996 = vpow.pop %v1995
        %v1997 = vmul.f32 %v1945, 1.442695
        %v1998 = vpow.pop %v1997
        %v1999 = vmul.f32 %v1946, 1.442695
        %v2000 = vpow.pop %v1999
        %v2001 = vmul.f32 %v1947, 1.442695
        %v2002 = vpow.pop %v2001
        %v2003 = vmul.f32 %v1948, 1.442695
        %v2004 = vpow.pop %v2003
        %v2005 = vmul.f32 %v1949, 1.442695
        %v2006 = vpow.pop %v2005
        %v2007 = vmul.f32 %v1950, 1.442695
        %v2008 = vpow.pop %v2007
        %v2009 = vmul.f32 %v1951, 1.442695
        %v2010 = vpow.pop %v2009
        %v2011 = vmul.f32 %v1952, 1.442695
        %v2012 = vpow.pop %v2011
        %v2013 = vmul.f32 %v1953, 1.442695
        %v2014 = vpow.pop %v2013
        %v2015 = vmul.f32 %v1954, 1.442695
        %v2016 = vpow.pop %v2015
        %v2017 = vmul.f32 %v1955, 1.442695
        %v2018 = vpow.pop %v2017
        %v2019 = vmul.f32 %v1956, 1.442695
        %v2020 = vpow.pop %v2019
        %v2021 = vsel %vm1828, %v1958, 0.0
        %2022 = vadd.xlane.f32.xlu0 %v2021
        %v2023 = vpop.xlane.xlu0 %2022
        %v2024 = vsel %vm1828, %v1960, 0.0
        %2025 = vadd.xlane.f32.xlu0 %v2024
        %v2026 = vpop.xlane.xlu0 %2025
        %v2027 = vsel %vm1828, %v1962, 0.0
        %2028 = vadd.xlane.f32.xlu0 %v2027
        %v2029 = vpop.xlane.xlu0 %2028
        %v2030 = vsel %vm1828, %v1964, 0.0
        %2031 = vadd.xlane.f32.xlu0 %v2030
        %v2032 = vpop.xlane.xlu0 %2031
        %v2033 = vsel %vm1828, %v1966, 0.0
        %2034 = vadd.xlane.f32.xlu0 %v2033
        %v2035 = vpop.xlane.xlu0 %2034
        %v2036 = vsel %vm1828, %v1968, 0.0
        %2037 = vadd.xlane.f32.xlu0 %v2036
        %v2038 = vpop.xlane.xlu0 %2037
        %v2039 = vsel %vm1828, %v1970, 0.0
        %2040 = vadd.xlane.f32.xlu0 %v2039
        %v2041 = vpop.xlane.xlu0 %2040
        %v2042 = vsel %vm1828, %v1972, 0.0
        %2043 = vadd.xlane.f32.xlu0 %v2042
        %v2044 = vpop.xlane.xlu0 %2043
        %v2045 = vsel %vm1828, %v1974, 0.0
        %2046 = vadd.xlane.f32.xlu0 %v2045
        %v2047 = vpop.xlane.xlu0 %2046
        %v2048 = vsel %vm1828, %v1976, 0.0
        %2049 = vadd.xlane.f32.xlu0 %v2048
        %v2050 = vpop.xlane.xlu0 %2049
        %v2051 = vsel %vm1828, %v1978, 0.0
        %2052 = vadd.xlane.f32.xlu0 %v2051
        %v2053 = vpop.xlane.xlu0 %2052
        %v2054 = vsel %vm1828, %v1980, 0.0
        %2055 = vadd.xlane.f32.xlu0 %v2054
        %v2056 = vpop.xlane.xlu0 %2055
        %v2057 = vsel %vm1828, %v1982, 0.0
        %2058 = vadd.xlane.f32.xlu0 %v2057
        %v2059 = vpop.xlane.xlu0 %2058
        %v2060 = vsel %vm1828, %v1984, 0.0
        %2061 = vadd.xlane.f32.xlu0 %v2060
        %v2062 = vpop.xlane.xlu0 %2061
        %v2063 = vsel %vm1828, %v1986, 0.0
        %2064 = vadd.xlane.f32.xlu0 %v2063
        %v2065 = vpop.xlane.xlu0 %2064
        %v2066 = vsel %vm1828, %v1988, 0.0
        %2067 = vadd.xlane.f32.xlu0 %v2066
        %v2068 = vpop.xlane.xlu0 %2067
        %v2069 = vsel %vm1828, %v1990, 0.0
        %2070 = vadd.xlane.f32.xlu0 %v2069
        %v2071 = vpop.xlane.xlu0 %2070
        %v2072 = vsel %vm1828, %v1992, 0.0
        %2073 = vadd.xlane.f32.xlu0 %v2072
        %v2074 = vpop.xlane.xlu0 %2073
        %v2075 = vsel %vm1828, %v1994, 0.0
        %2076 = vadd.xlane.f32.xlu0 %v2075
        %v2077 = vpop.xlane.xlu0 %2076
        %v2078 = vsel %vm1828, %v1996, 0.0
        %2079 = vadd.xlane.f32.xlu0 %v2078
        %v2080 = vpop.xlane.xlu0 %2079
        %v2081 = vsel %vm1828, %v1998, 0.0
        %2082 = vadd.xlane.f32.xlu0 %v2081
        %v2083 = vpop.xlane.xlu0 %2082
        %v2084 = vsel %vm1828, %v2000, 0.0
        %2085 = vadd.xlane.f32.xlu0 %v2084
        %v2086 = vpop.xlane.xlu0 %2085
        %v2087 = vsel %vm1828, %v2002, 0.0
        %2088 = vadd.xlane.f32.xlu0 %v2087
        %v2089 = vpop.xlane.xlu0 %2088
        %v2090 = vsel %vm1828, %v2004, 0.0
        %2091 = vadd.xlane.f32.xlu0 %v2090
        %v2092 = vpop.xlane.xlu0 %2091
        %v2093 = vsel %vm1828, %v2006, 0.0
        %2094 = vadd.xlane.f32.xlu0 %v2093
        %v2095 = vpop.xlane.xlu0 %2094
        %v2096 = vsel %vm1828, %v2008, 0.0
        %2097 = vadd.xlane.f32.xlu0 %v2096
        %v2098 = vpop.xlane.xlu0 %2097
        %v2099 = vsel %vm1828, %v2010, 0.0
        %2100 = vadd.xlane.f32.xlu0 %v2099
        %v2101 = vpop.xlane.xlu0 %2100
        %v2102 = vsel %vm1828, %v2012, 0.0
        %2103 = vadd.xlane.f32.xlu0 %v2102
        %v2104 = vpop.xlane.xlu0 %2103
        %v2105 = vsel %vm1828, %v2014, 0.0
        %2106 = vadd.xlane.f32.xlu0 %v2105
        %v2107 = vpop.xlane.xlu0 %2106
        %v2108 = vsel %vm1828, %v2016, 0.0
        %2109 = vadd.xlane.f32.xlu0 %v2108
        %v2110 = vpop.xlane.xlu0 %2109
        %v2111 = vsel %vm1828, %v2018, 0.0
        %2112 = vadd.xlane.f32.xlu0 %v2111
        %v2113 = vpop.xlane.xlu0 %2112
        %v2114 = vsel %vm1828, %v2020, 0.0
        %2115 = vadd.xlane.f32.xlu0 %v2114
        %v2116 = vpop.xlane.xlu0 %2115
        %v2117 = vmul.f32 %v539, %v1958
        %v2118 = vmul.f32 %v540, %v1960
        %v2119 = vmul.f32 %v541, %v1962
        %v2120 = vmul.f32 %v542, %v1964
        %v2121 = vmul.f32 %v539, %v1966
        %v2122 = vmul.f32 %v540, %v1968
        %v2123 = vmul.f32 %v541, %v1970
        %v2124 = vmul.f32 %v542, %v1972
        %v2125 = vmul.f32 %v539, %v1974
        %v2126 = vmul.f32 %v540, %v1976
        %v2127 = vmul.f32 %v541, %v1978
        %v2128 = vmul.f32 %v542, %v1980
        %v2129 = vmul.f32 %v539, %v1982
        %v2130 = vmul.f32 %v540, %v1984
        %v2131 = vmul.f32 %v541, %v1986
        %v2132 = vmul.f32 %v542, %v1988
        %v2133 = vmul.f32 %v539, %v1990
        %v2134 = vmul.f32 %v540, %v1992
        %v2135 = vmul.f32 %v541, %v1994
        %v2136 = vmul.f32 %v542, %v1996
        %v2137 = vmul.f32 %v539, %v1998
        %v2138 = vmul.f32 %v540, %v2000
        %v2139 = vmul.f32 %v541, %v2002
        %v2140 = vmul.f32 %v542, %v2004
        %v2141 = vmul.f32 %v539, %v2006
        %v2142 = vmul.f32 %v540, %v2008
        %v2143 = vmul.f32 %v541, %v2010
        %v2144 = vmul.f32 %v542, %v2012
        %v2145 = vmul.f32 %v539, %v2014
        %v2146 = vmul.f32 %v540, %v2016
        %v2147 = vmul.f32 %v541, %v2018
        %v2148 = vmul.f32 %v542, %v2020
        %v2149 = vsel %vm1828, %v2117, 0.0
        %2150 = vadd.xlane.f32.xlu0 %v2149
        %v2151 = vpop.xlane.xlu0 %2150
        %v2152 = vsel %vm1828, %v2118, 0.0
        %2153 = vadd.xlane.f32.xlu0 %v2152
        %v2154 = vpop.xlane.xlu0 %2153
        %v2155 = vsel %vm1828, %v2119, 0.0
        %2156 = vadd.xlane.f32.xlu0 %v2155
        %v2157 = vpop.xlane.xlu0 %2156
        %v2158 = vsel %vm1828, %v2120, 0.0
        %2159 = vadd.xlane.f32.xlu0 %v2158
        %v2160 = vpop.xlane.xlu0 %2159
        %v2161 = vsel %vm1828, %v2121, 0.0
        %2162 = vadd.xlane.f32.xlu0 %v2161
        %v2163 = vpop.xlane.xlu0 %2162
        %v2164 = vsel %vm1828, %v2122, 0.0
        %2165 = vadd.xlane.f32.xlu0 %v2164
        %v2166 = vpop.xlane.xlu0 %2165
        %v2167 = vsel %vm1828, %v2123, 0.0
        %2168 = vadd.xlane.f32.xlu0 %v2167
        %v2169 = vpop.xlane.xlu0 %2168
        %v2170 = vsel %vm1828, %v2124, 0.0
        %2171 = vadd.xlane.f32.xlu0 %v2170
        %v2172 = vpop.xlane.xlu0 %2171
        %v2173 = vsel %vm1828, %v2125, 0.0
        %2174 = vadd.xlane.f32.xlu0 %v2173
        %v2175 = vpop.xlane.xlu0 %2174
        %v2176 = vsel %vm1828, %v2126, 0.0
        %2177 = vadd.xlane.f32.xlu0 %v2176
        %v2178 = vpop.xlane.xlu0 %2177
        %v2179 = vsel %vm1828, %v2127, 0.0
        %2180 = vadd.xlane.f32.xlu0 %v2179
        %v2181 = vpop.xlane.xlu0 %2180
        %v2182 = vsel %vm1828, %v2128, 0.0
        %2183 = vadd.xlane.f32.xlu0 %v2182
        %v2184 = vpop.xlane.xlu0 %2183
        %v2185 = vsel %vm1828, %v2129, 0.0
        %2186 = vadd.xlane.f32.xlu0 %v2185
        %v2187 = vpop.xlane.xlu0 %2186
        %v2188 = vsel %vm1828, %v2130, 0.0
        %2189 = vadd.xlane.f32.xlu0 %v2188
        %v2190 = vpop.xlane.xlu0 %2189
        %v2191 = vsel %vm1828, %v2131, 0.0
        %2192 = vadd.xlane.f32.xlu0 %v2191
        %v2193 = vpop.xlane.xlu0 %2192
        %v2194 = vsel %vm1828, %v2132, 0.0
        %2195 = vadd.xlane.f32.xlu0 %v2194
        %v2196 = vpop.xlane.xlu0 %2195
        %v2197 = vsel %vm1828, %v2133, 0.0
        %2198 = vadd.xlane.f32.xlu0 %v2197
        %v2199 = vpop.xlane.xlu0 %2198
        %v2200 = vsel %vm1828, %v2134, 0.0
        %2201 = vadd.xlane.f32.xlu0 %v2200
        %v2202 = vpop.xlane.xlu0 %2201
        %v2203 = vsel %vm1828, %v2135, 0.0
        %2204 = vadd.xlane.f32.xlu0 %v2203
        %v2205 = vpop.xlane.xlu0 %2204
        %v2206 = vsel %vm1828, %v2136, 0.0
        %2207 = vadd.xlane.f32.xlu0 %v2206
        %v2208 = vpop.xlane.xlu0 %2207
        %v2209 = vsel %vm1828, %v2137, 0.0
        %2210 = vadd.xlane.f32.xlu0 %v2209
        %v2211 = vpop.xlane.xlu0 %2210
        %v2212 = vsel %vm1828, %v2138, 0.0
        %2213 = vadd.xlane.f32.xlu0 %v2212
        %v2214 = vpop.xlane.xlu0 %2213
        %v2215 = vsel %vm1828, %v2139, 0.0
        %2216 = vadd.xlane.f32.xlu0 %v2215
        %v2217 = vpop.xlane.xlu0 %2216
        %v2218 = vsel %vm1828, %v2140, 0.0
        %2219 = vadd.xlane.f32.xlu0 %v2218
        %v2220 = vpop.xlane.xlu0 %2219
        %v2221 = vsel %vm1828, %v2141, 0.0
        %2222 = vadd.xlane.f32.xlu0 %v2221
        %v2223 = vpop.xlane.xlu0 %2222
        %v2224 = vsel %vm1828, %v2142, 0.0
        %2225 = vadd.xlane.f32.xlu0 %v2224
        %v2226 = vpop.xlane.xlu0 %2225
        %v2227 = vsel %vm1828, %v2143, 0.0
        %2228 = vadd.xlane.f32.xlu0 %v2227
        %v2229 = vpop.xlane.xlu0 %2228
        %v2230 = vsel %vm1828, %v2144, 0.0
        %2231 = vadd.xlane.f32.xlu0 %v2230
        %v2232 = vpop.xlane.xlu0 %2231
        %v2233 = vsel %vm1828, %v2145, 0.0
        %2234 = vadd.xlane.f32.xlu0 %v2233
        %v2235 = vpop.xlane.xlu0 %2234
        %v2236 = vsel %vm1828, %v2146, 0.0
        %2237 = vadd.xlane.f32.xlu0 %v2236
        %v2238 = vpop.xlane.xlu0 %2237
        %v2239 = vsel %vm1828, %v2147, 0.0
        %2240 = vadd.xlane.f32.xlu0 %v2239
        %v2241 = vpop.xlane.xlu0 %2240
        %v2242 = vsel %vm1828, %v2148, 0.0
        %2243 = vadd.xlane.f32.xlu0 %v2242
        %v2244 = vpop.xlane.xlu0 %2243
        %v2245 = vrcp.pop %v2023
        %v2246 = vmul.f32 %v2023, %v2245
        %v2247 = vsub.f32 1.0, %v2246
        %v2248 = vmul.f32 %v2245, %v2247
        %v2249 = vadd.f32 %v2245, %v2248
        %vm2250 = vweird.f32 %v2023
        %vm2251 = vweird.f32 %v2245
        %vm2252 = vmor %vm2250, %vm2251
        %v2253 = vsel %vm2252, %v2245, %v2249
        %v2254 = vand.u32 2147483647, %v2023
        %vm2255 = vcmp.eq.f32.partialorder %v2254, 8.507059e+37
        %v2256 = vand.u32 %v2023, 2147483648
        %v2257 = vor.u32 1.1754944e-38, %v2256
        %v2258 = vsel %vm2255, %v2257, %v2253
        %v2259 = vmul.f32 %v2151, %v2258
        %v2260 = vrcp.pop %v2026
        %v2261 = vmul.f32 %v2026, %v2260
        %v2262 = vsub.f32 1.0, %v2261
        %v2263 = vmul.f32 %v2260, %v2262
        %v2264 = vadd.f32 %v2260, %v2263
        %vm2265 = vweird.f32 %v2026
        %vm2266 = vweird.f32 %v2260
        %vm2267 = vmor %vm2265, %vm2266
        %v2268 = vsel %vm2267, %v2260, %v2264
        %v2269 = vand.u32 2147483647, %v2026
        %vm2270 = vcmp.eq.f32.partialorder %v2269, 8.507059e+37
        %v2271 = vand.u32 %v2026, 2147483648
        %v2272 = vor.u32 1.1754944e-38, %v2271
        %v2273 = vsel %vm2270, %v2272, %v2268
        %v2274 = vmul.f32 %v2154, %v2273
        %v2275 = vrcp.pop %v2029
        %v2276 = vmul.f32 %v2029, %v2275
        %v2277 = vsub.f32 1.0, %v2276
        %v2278 = vmul.f32 %v2275, %v2277
        %v2279 = vadd.f32 %v2275, %v2278
        %vm2280 = vweird.f32 %v2029
        %vm2281 = vweird.f32 %v2275
        %vm2282 = vmor %vm2280, %vm2281
        %v2283 = vsel %vm2282, %v2275, %v2279
        %v2284 = vand.u32 2147483647, %v2029
        %vm2285 = vcmp.eq.f32.partialorder %v2284, 8.507059e+37
        %v2286 = vand.u32 %v2029, 2147483648
        %v2287 = vor.u32 1.1754944e-38, %v2286
        %v2288 = vsel %vm2285, %v2287, %v2283
        %v2289 = vmul.f32 %v2157, %v2288
        %v2290 = vrcp.pop %v2032
        %v2291 = vmul.f32 %v2032, %v2290
        %v2292 = vsub.f32 1.0, %v2291
        %v2293 = vmul.f32 %v2290, %v2292
        %v2294 = vadd.f32 %v2290, %v2293
        %vm2295 = vweird.f32 %v2032
        %vm2296 = vweird.f32 %v2290
        %vm2297 = vmor %vm2295, %vm2296
        %v2298 = vsel %vm2297, %v2290, %v2294
        %v2299 = vand.u32 2147483647, %v2032
        %vm2300 = vcmp.eq.f32.partialorder %v2299, 8.507059e+37
        %v2301 = vand.u32 %v2032, 2147483648
        %v2302 = vor.u32 1.1754944e-38, %v2301
        %v2303 = vsel %vm2300, %v2302, %v2298
        %v2304 = vmul.f32 %v2160, %v2303
        %v2305 = vrcp.pop %v2035
        %v2306 = vmul.f32 %v2035, %v2305
        %v2307 = vsub.f32 1.0, %v2306
        %v2308 = vmul.f32 %v2305, %v2307
        %v2309 = vadd.f32 %v2305, %v2308
        %vm2310 = vweird.f32 %v2035
        %vm2311 = vweird.f32 %v2305
        %vm2312 = vmor %vm2310, %vm2311
        %v2313 = vsel %vm2312, %v2305, %v2309
        %v2314 = vand.u32 2147483647, %v2035
        %vm2315 = vcmp.eq.f32.partialorder %v2314, 8.507059e+37
        %v2316 = vand.u32 %v2035, 2147483648
        %v2317 = vor.u32 1.1754944e-38, %v2316
        %v2318 = vsel %vm2315, %v2317, %v2313
        %v2319 = vmul.f32 %v2163, %v2318
        %v2320 = vrcp.pop %v2038
        %v2321 = vmul.f32 %v2038, %v2320
        %v2322 = vsub.f32 1.0, %v2321
        %v2323 = vmul.f32 %v2320, %v2322
        %v2324 = vadd.f32 %v2320, %v2323
        %vm2325 = vweird.f32 %v2038
        %vm2326 = vweird.f32 %v2320
        %vm2327 = vmor %vm2325, %vm2326
        %v2328 = vsel %vm2327, %v2320, %v2324
        %v2329 = vand.u32 2147483647, %v2038
        %vm2330 = vcmp.eq.f32.partialorder %v2329, 8.507059e+37
        %v2331 = vand.u32 %v2038, 2147483648
        %v2332 = vor.u32 1.1754944e-38, %v2331
        %v2333 = vsel %vm2330, %v2332, %v2328
        %v2334 = vmul.f32 %v2166, %v2333
        %v2335 = vrcp.pop %v2041
        %v2336 = vmul.f32 %v2041, %v2335
        %v2337 = vsub.f32 1.0, %v2336
        %v2338 = vmul.f32 %v2335, %v2337
        %v2339 = vadd.f32 %v2335, %v2338
        %vm2340 = vweird.f32 %v2041
        %vm2341 = vweird.f32 %v2335
        %vm2342 = vmor %vm2340, %vm2341
        %v2343 = vsel %vm2342, %v2335, %v2339
        %v2344 = vand.u32 2147483647, %v2041
        %vm2345 = vcmp.eq.f32.partialorder %v2344, 8.507059e+37
        %v2346 = vand.u32 %v2041, 2147483648
        %v2347 = vor.u32 1.1754944e-38, %v2346
        %v2348 = vsel %vm2345, %v2347, %v2343
        %v2349 = vmul.f32 %v2169, %v2348
        %v2350 = vrcp.pop %v2044
        %v2351 = vmul.f32 %v2044, %v2350
        %v2352 = vsub.f32 1.0, %v2351
        %v2353 = vmul.f32 %v2350, %v2352
        %v2354 = vadd.f32 %v2350, %v2353
        %vm2355 = vweird.f32 %v2044
        %vm2356 = vweird.f32 %v2350
        %vm2357 = vmor %vm2355, %vm2356
        %v2358 = vsel %vm2357, %v2350, %v2354
        %v2359 = vand.u32 2147483647, %v2044
        %vm2360 = vcmp.eq.f32.partialorder %v2359, 8.507059e+37
        %v2361 = vand.u32 %v2044, 2147483648
        %v2362 = vor.u32 1.1754944e-38, %v2361
        %v2363 = vsel %vm2360, %v2362, %v2358
        %v2364 = vmul.f32 %v2172, %v2363
        %v2365 = vrcp.pop %v2047
        %v2366 = vmul.f32 %v2047, %v2365
        %v2367 = vsub.f32 1.0, %v2366
        %v2368 = vmul.f32 %v2365, %v2367
        %v2369 = vadd.f32 %v2365, %v2368
        %vm2370 = vweird.f32 %v2047
        %vm2371 = vweird.f32 %v2365
        %vm2372 = vmor %vm2370, %vm2371
        %v2373 = vsel %vm2372, %v2365, %v2369
        %v2374 = vand.u32 2147483647, %v2047
        %vm2375 = vcmp.eq.f32.partialorder %v2374, 8.507059e+37
        %v2376 = vand.u32 %v2047, 2147483648
        %v2377 = vor.u32 1.1754944e-38, %v2376
        %v2378 = vsel %vm2375, %v2377, %v2373
        %v2379 = vmul.f32 %v2175, %v2378
        %v2380 = vrcp.pop %v2050
        %v2381 = vmul.f32 %v2050, %v2380
        %v2382 = vsub.f32 1.0, %v2381
        %v2383 = vmul.f32 %v2380, %v2382
        %v2384 = vadd.f32 %v2380, %v2383
        %vm2385 = vweird.f32 %v2050
        %vm2386 = vweird.f32 %v2380
        %vm2387 = vmor %vm2385, %vm2386
        %v2388 = vsel %vm2387, %v2380, %v2384
        %v2389 = vand.u32 2147483647, %v2050
        %vm2390 = vcmp.eq.f32.partialorder %v2389, 8.507059e+37
        %v2391 = vand.u32 %v2050, 2147483648
        %v2392 = vor.u32 1.1754944e-38, %v2391
        %v2393 = vsel %vm2390, %v2392, %v2388
        %v2394 = vmul.f32 %v2178, %v2393
        %v2395 = vrcp.pop %v2053
        %v2396 = vmul.f32 %v2053, %v2395
        %v2397 = vsub.f32 1.0, %v2396
        %v2398 = vmul.f32 %v2395, %v2397
        %v2399 = vadd.f32 %v2395, %v2398
        %vm2400 = vweird.f32 %v2053
        %vm2401 = vweird.f32 %v2395
        %vm2402 = vmor %vm2400, %vm2401
        %v2403 = vsel %vm2402, %v2395, %v2399
        %v2404 = vand.u32 2147483647, %v2053
        %vm2405 = vcmp.eq.f32.partialorder %v2404, 8.507059e+37
        %v2406 = vand.u32 %v2053, 2147483648
        %v2407 = vor.u32 1.1754944e-38, %v2406
        %v2408 = vsel %vm2405, %v2407, %v2403
        %v2409 = vmul.f32 %v2181, %v2408
        %v2410 = vrcp.pop %v2056
        %v2411 = vmul.f32 %v2056, %v2410
        %v2412 = vsub.f32 1.0, %v2411
        %v2413 = vmul.f32 %v2410, %v2412
        %v2414 = vadd.f32 %v2410, %v2413
        %vm2415 = vweird.f32 %v2056
        %vm2416 = vweird.f32 %v2410
        %vm2417 = vmor %vm2415, %vm2416
        %v2418 = vsel %vm2417, %v2410, %v2414
        %v2419 = vand.u32 2147483647, %v2056
        %vm2420 = vcmp.eq.f32.partialorder %v2419, 8.507059e+37
        %v2421 = vand.u32 %v2056, 2147483648
        %v2422 = vor.u32 1.1754944e-38, %v2421
        %v2423 = vsel %vm2420, %v2422, %v2418
        %v2424 = vmul.f32 %v2184, %v2423
        %v2425 = vrcp.pop %v2059
        %v2426 = vmul.f32 %v2059, %v2425
        %v2427 = vsub.f32 1.0, %v2426
        %v2428 = vmul.f32 %v2425, %v2427
        %v2429 = vadd.f32 %v2425, %v2428
        %vm2430 = vweird.f32 %v2059
        %vm2431 = vweird.f32 %v2425
        %vm2432 = vmor %vm2430, %vm2431
        %v2433 = vsel %vm2432, %v2425, %v2429
        %v2434 = vand.u32 2147483647, %v2059
        %vm2435 = vcmp.eq.f32.partialorder %v2434, 8.507059e+37
        %v2436 = vand.u32 %v2059, 2147483648
        %v2437 = vor.u32 1.1754944e-38, %v2436
        %v2438 = vsel %vm2435, %v2437, %v2433
        %v2439 = vmul.f32 %v2187, %v2438
        %v2440 = vrcp.pop %v2062
        %v2441 = vmul.f32 %v2062, %v2440
        %v2442 = vsub.f32 1.0, %v2441
        %v2443 = vmul.f32 %v2440, %v2442
        %v2444 = vadd.f32 %v2440, %v2443
        %vm2445 = vweird.f32 %v2062
        %vm2446 = vweird.f32 %v2440
        %vm2447 = vmor %vm2445, %vm2446
        %v2448 = vsel %vm2447, %v2440, %v2444
        %v2449 = vand.u32 2147483647, %v2062
        %vm2450 = vcmp.eq.f32.partialorder %v2449, 8.507059e+37
        %v2451 = vand.u32 %v2062, 2147483648
        %v2452 = vor.u32 1.1754944e-38, %v2451
        %v2453 = vsel %vm2450, %v2452, %v2448
        %v2454 = vmul.f32 %v2190, %v2453
        %v2455 = vrcp.pop %v2065
        %v2456 = vmul.f32 %v2065, %v2455
        %v2457 = vsub.f32 1.0, %v2456
        %v2458 = vmul.f32 %v2455, %v2457
        %v2459 = vadd.f32 %v2455, %v2458
        %vm2460 = vweird.f32 %v2065
        %vm2461 = vweird.f32 %v2455
        %vm2462 = vmor %vm2460, %vm2461
        %v2463 = vsel %vm2462, %v2455, %v2459
        %v2464 = vand.u32 2147483647, %v2065
        %vm2465 = vcmp.eq.f32.partialorder %v2464, 8.507059e+37
        %v2466 = vand.u32 %v2065, 2147483648
        %v2467 = vor.u32 1.1754944e-38, %v2466
        %v2468 = vsel %vm2465, %v2467, %v2463
        %v2469 = vmul.f32 %v2193, %v2468
        %v2470 = vrcp.pop %v2068
        %v2471 = vmul.f32 %v2068, %v2470
        %v2472 = vsub.f32 1.0, %v2471
        %v2473 = vmul.f32 %v2470, %v2472
        %v2474 = vadd.f32 %v2470, %v2473
        %vm2475 = vweird.f32 %v2068
        %vm2476 = vweird.f32 %v2470
        %vm2477 = vmor %vm2475, %vm2476
        %v2478 = vsel %vm2477, %v2470, %v2474
        %v2479 = vand.u32 2147483647, %v2068
        %vm2480 = vcmp.eq.f32.partialorder %v2479, 8.507059e+37
        %v2481 = vand.u32 %v2068, 2147483648
        %v2482 = vor.u32 1.1754944e-38, %v2481
        %v2483 = vsel %vm2480, %v2482, %v2478
        %v2484 = vmul.f32 %v2196, %v2483
        %v2485 = vrcp.pop %v2071
        %v2486 = vmul.f32 %v2071, %v2485
        %v2487 = vsub.f32 1.0, %v2486
        %v2488 = vmul.f32 %v2485, %v2487
        %v2489 = vadd.f32 %v2485, %v2488
        %vm2490 = vweird.f32 %v2071
        %vm2491 = vweird.f32 %v2485
        %vm2492 = vmor %vm2490, %vm2491
        %v2493 = vsel %vm2492, %v2485, %v2489
        %v2494 = vand.u32 2147483647, %v2071
        %vm2495 = vcmp.eq.f32.partialorder %v2494, 8.507059e+37
        %v2496 = vand.u32 %v2071, 2147483648
        %v2497 = vor.u32 1.1754944e-38, %v2496
        %v2498 = vsel %vm2495, %v2497, %v2493
        %v2499 = vmul.f32 %v2199, %v2498
        %v2500 = vrcp.pop %v2074
        %v2501 = vmul.f32 %v2074, %v2500
        %v2502 = vsub.f32 1.0, %v2501
        %v2503 = vmul.f32 %v2500, %v2502
        %v2504 = vadd.f32 %v2500, %v2503
        %vm2505 = vweird.f32 %v2074
        %vm2506 = vweird.f32 %v2500
        %vm2507 = vmor %vm2505, %vm2506
        %v2508 = vsel %vm2507, %v2500, %v2504
        %v2509 = vand.u32 2147483647, %v2074
        %vm2510 = vcmp.eq.f32.partialorder %v2509, 8.507059e+37
        %v2511 = vand.u32 %v2074, 2147483648
        %v2512 = vor.u32 1.1754944e-38, %v2511
        %v2513 = vsel %vm2510, %v2512, %v2508
        %v2514 = vmul.f32 %v2202, %v2513
        %v2515 = vrcp.pop %v2077
        %v2516 = vmul.f32 %v2077, %v2515
        %v2517 = vsub.f32 1.0, %v2516
        %v2518 = vmul.f32 %v2515, %v2517
        %v2519 = vadd.f32 %v2515, %v2518
        %vm2520 = vweird.f32 %v2077
        %vm2521 = vweird.f32 %v2515
        %vm2522 = vmor %vm2520, %vm2521
        %v2523 = vsel %vm2522, %v2515, %v2519
        %v2524 = vand.u32 2147483647, %v2077
        %vm2525 = vcmp.eq.f32.partialorder %v2524, 8.507059e+37
        %v2526 = vand.u32 %v2077, 2147483648
        %v2527 = vor.u32 1.1754944e-38, %v2526
        %v2528 = vsel %vm2525, %v2527, %v2523
        %v2529 = vmul.f32 %v2205, %v2528
        %v2530 = vrcp.pop %v2080
        %v2531 = vmul.f32 %v2080, %v2530
        %v2532 = vsub.f32 1.0, %v2531
        %v2533 = vmul.f32 %v2530, %v2532
        %v2534 = vadd.f32 %v2530, %v2533
        %vm2535 = vweird.f32 %v2080
        %vm2536 = vweird.f32 %v2530
        %vm2537 = vmor %vm2535, %vm2536
        %v2538 = vsel %vm2537, %v2530, %v2534
        %v2539 = vand.u32 2147483647, %v2080
        %vm2540 = vcmp.eq.f32.partialorder %v2539, 8.507059e+37
        %v2541 = vand.u32 %v2080, 2147483648
        %v2542 = vor.u32 1.1754944e-38, %v2541
        %v2543 = vsel %vm2540, %v2542, %v2538
        %v2544 = vmul.f32 %v2208, %v2543
        %v2545 = vrcp.pop %v2083
        %v2546 = vmul.f32 %v2083, %v2545
        %v2547 = vsub.f32 1.0, %v2546
        %v2548 = vmul.f32 %v2545, %v2547
        %v2549 = vadd.f32 %v2545, %v2548
        %vm2550 = vweird.f32 %v2083
        %vm2551 = vweird.f32 %v2545
        %vm2552 = vmor %vm2550, %vm2551
        %v2553 = vsel %vm2552, %v2545, %v2549
        %v2554 = vand.u32 2147483647, %v2083
        %vm2555 = vcmp.eq.f32.partialorder %v2554, 8.507059e+37
        %v2556 = vand.u32 %v2083, 2147483648
        %v2557 = vor.u32 1.1754944e-38, %v2556
        %v2558 = vsel %vm2555, %v2557, %v2553
        %v2559 = vmul.f32 %v2211, %v2558
        %v2560 = vrcp.pop %v2086
        %v2561 = vmul.f32 %v2086, %v2560
        %v2562 = vsub.f32 1.0, %v2561
        %v2563 = vmul.f32 %v2560, %v2562
        %v2564 = vadd.f32 %v2560, %v2563
        %vm2565 = vweird.f32 %v2086
        %vm2566 = vweird.f32 %v2560
        %vm2567 = vmor %vm2565, %vm2566
        %v2568 = vsel %vm2567, %v2560, %v2564
        %v2569 = vand.u32 2147483647, %v2086
        %vm2570 = vcmp.eq.f32.partialorder %v2569, 8.507059e+37
        %v2571 = vand.u32 %v2086, 2147483648
        %v2572 = vor.u32 1.1754944e-38, %v2571
        %v2573 = vsel %vm2570, %v2572, %v2568
        %v2574 = vmul.f32 %v2214, %v2573
        %v2575 = vrcp.pop %v2089
        %v2576 = vmul.f32 %v2089, %v2575
        %v2577 = vsub.f32 1.0, %v2576
        %v2578 = vmul.f32 %v2575, %v2577
        %v2579 = vadd.f32 %v2575, %v2578
        %vm2580 = vweird.f32 %v2089
        %vm2581 = vweird.f32 %v2575
        %vm2582 = vmor %vm2580, %vm2581
        %v2583 = vsel %vm2582, %v2575, %v2579
        %v2584 = vand.u32 2147483647, %v2089
        %vm2585 = vcmp.eq.f32.partialorder %v2584, 8.507059e+37
        %v2586 = vand.u32 %v2089, 2147483648
        %v2587 = vor.u32 1.1754944e-38, %v2586
        %v2588 = vsel %vm2585, %v2587, %v2583
        %v2589 = vmul.f32 %v2217, %v2588
        %v2590 = vrcp.pop %v2092
        %v2591 = vmul.f32 %v2092, %v2590
        %v2592 = vsub.f32 1.0, %v2591
        %v2593 = vmul.f32 %v2590, %v2592
        %v2594 = vadd.f32 %v2590, %v2593
        %vm2595 = vweird.f32 %v2092
        %vm2596 = vweird.f32 %v2590
        %vm2597 = vmor %vm2595, %vm2596
        %v2598 = vsel %vm2597, %v2590, %v2594
        %v2599 = vand.u32 2147483647, %v2092
        %vm2600 = vcmp.eq.f32.partialorder %v2599, 8.507059e+37
        %v2601 = vand.u32 %v2092, 2147483648
        %v2602 = vor.u32 1.1754944e-38, %v2601
        %v2603 = vsel %vm2600, %v2602, %v2598
        %v2604 = vmul.f32 %v2220, %v2603
        %v2605 = vrcp.pop %v2095
        %v2606 = vmul.f32 %v2095, %v2605
        %v2607 = vsub.f32 1.0, %v2606
        %v2608 = vmul.f32 %v2605, %v2607
        %v2609 = vadd.f32 %v2605, %v2608
        %vm2610 = vweird.f32 %v2095
        %vm2611 = vweird.f32 %v2605
        %vm2612 = vmor %vm2610, %vm2611
        %v2613 = vsel %vm2612, %v2605, %v2609
        %v2614 = vand.u32 2147483647, %v2095
        %vm2615 = vcmp.eq.f32.partialorder %v2614, 8.507059e+37
        %v2616 = vand.u32 %v2095, 2147483648
        %v2617 = vor.u32 1.1754944e-38, %v2616
        %v2618 = vsel %vm2615, %v2617, %v2613
        %v2619 = vmul.f32 %v2223, %v2618
        %v2620 = vrcp.pop %v2098
        %v2621 = vmul.f32 %v2098, %v2620
        %v2622 = vsub.f32 1.0, %v2621
        %v2623 = vmul.f32 %v2620, %v2622
        %v2624 = vadd.f32 %v2620, %v2623
        %vm2625 = vweird.f32 %v2098
        %vm2626 = vweird.f32 %v2620
        %vm2627 = vmor %vm2625, %vm2626
        %v2628 = vsel %vm2627, %v2620, %v2624
        %v2629 = vand.u32 2147483647, %v2098
        %vm2630 = vcmp.eq.f32.partialorder %v2629, 8.507059e+37
        %v2631 = vand.u32 %v2098, 2147483648
        %v2632 = vor.u32 1.1754944e-38, %v2631
        %v2633 = vsel %vm2630, %v2632, %v2628
        %v2634 = vmul.f32 %v2226, %v2633
        %v2635 = vrcp.pop %v2101
        %v2636 = vmul.f32 %v2101, %v2635
        %v2637 = vsub.f32 1.0, %v2636
        %v2638 = vmul.f32 %v2635, %v2637
        %v2639 = vadd.f32 %v2635, %v2638
        %vm2640 = vweird.f32 %v2101
        %vm2641 = vweird.f32 %v2635
        %vm2642 = vmor %vm2640, %vm2641
        %v2643 = vsel %vm2642, %v2635, %v2639
        %v2644 = vand.u32 2147483647, %v2101
        %vm2645 = vcmp.eq.f32.partialorder %v2644, 8.507059e+37
        %v2646 = vand.u32 %v2101, 2147483648
        %v2647 = vor.u32 1.1754944e-38, %v2646
        %v2648 = vsel %vm2645, %v2647, %v2643
        %v2649 = vmul.f32 %v2229, %v2648
        %v2650 = vrcp.pop %v2104
        %v2651 = vmul.f32 %v2104, %v2650
        %v2652 = vsub.f32 1.0, %v2651
        %v2653 = vmul.f32 %v2650, %v2652
        %v2654 = vadd.f32 %v2650, %v2653
        %vm2655 = vweird.f32 %v2104
        %vm2656 = vweird.f32 %v2650
        %vm2657 = vmor %vm2655, %vm2656
        %v2658 = vsel %vm2657, %v2650, %v2654
        %v2659 = vand.u32 2147483647, %v2104
        %vm2660 = vcmp.eq.f32.partialorder %v2659, 8.507059e+37
        %v2661 = vand.u32 %v2104, 2147483648
        %v2662 = vor.u32 1.1754944e-38, %v2661
        %v2663 = vsel %vm2660, %v2662, %v2658
        %v2664 = vmul.f32 %v2232, %v2663
        %v2665 = vrcp.pop %v2107
        %v2666 = vmul.f32 %v2107, %v2665
        %v2667 = vsub.f32 1.0, %v2666
        %v2668 = vmul.f32 %v2665, %v2667
        %v2669 = vadd.f32 %v2665, %v2668
        %vm2670 = vweird.f32 %v2107
        %vm2671 = vweird.f32 %v2665
        %vm2672 = vmor %vm2670, %vm2671
        %v2673 = vsel %vm2672, %v2665, %v2669
        %v2674 = vand.u32 2147483647, %v2107
        %vm2675 = vcmp.eq.f32.partialorder %v2674, 8.507059e+37
        %v2676 = vand.u32 %v2107, 2147483648
        %v2677 = vor.u32 1.1754944e-38, %v2676
        %v2678 = vsel %vm2675, %v2677, %v2673
        %v2679 = vmul.f32 %v2235, %v2678
        %v2680 = vrcp.pop %v2110
        %v2681 = vmul.f32 %v2110, %v2680
        %v2682 = vsub.f32 1.0, %v2681
        %v2683 = vmul.f32 %v2680, %v2682
        %v2684 = vadd.f32 %v2680, %v2683
        %vm2685 = vweird.f32 %v2110
        %vm2686 = vweird.f32 %v2680
        %vm2687 = vmor %vm2685, %vm2686
        %v2688 = vsel %vm2687, %v2680, %v2684
        %v2689 = vand.u32 2147483647, %v2110
        %vm2690 = vcmp.eq.f32.partialorder %v2689, 8.507059e+37
        %v2691 = vand.u32 %v2110, 2147483648
        %v2692 = vor.u32 1.1754944e-38, %v2691
        %v2693 = vsel %vm2690, %v2692, %v2688
        %v2694 = vmul.f32 %v2238, %v2693
        %v2695 = vrcp.pop %v2113
        %v2696 = vmul.f32 %v2113, %v2695
        %v2697 = vsub.f32 1.0, %v2696
        %v2698 = vmul.f32 %v2695, %v2697
        %v2699 = vadd.f32 %v2695, %v2698
        %vm2700 = vweird.f32 %v2113
        %vm2701 = vweird.f32 %v2695
        %vm2702 = vmor %vm2700, %vm2701
        %v2703 = vsel %vm2702, %v2695, %v2699
        %v2704 = vand.u32 2147483647, %v2113
        %vm2705 = vcmp.eq.f32.partialorder %v2704, 8.507059e+37
        %v2706 = vand.u32 %v2113, 2147483648
        %v2707 = vor.u32 1.1754944e-38, %v2706
        %v2708 = vsel %vm2705, %v2707, %v2703
        %v2709 = vmul.f32 %v2241, %v2708
        %v2710 = vrcp.pop %v2116
        %v2711 = vmul.f32 %v2116, %v2710
        %v2712 = vsub.f32 1.0, %v2711
        %v2713 = vmul.f32 %v2710, %v2712
        %v2714 = vadd.f32 %v2710, %v2713
        %vm2715 = vweird.f32 %v2116
        %vm2716 = vweird.f32 %v2710
        %vm2717 = vmor %vm2715, %vm2716
        %v2718 = vsel %vm2717, %v2710, %v2714
        %v2719 = vand.u32 2147483647, %v2116
        %vm2720 = vcmp.eq.f32.partialorder %v2719, 8.507059e+37
        %v2721 = vand.u32 %v2116, 2147483648
        %v2722 = vor.u32 1.1754944e-38, %v2721
        %v2723 = vsel %vm2720, %v2722, %v2718
        %v2724 = vmul.f32 %v2244, %v2723
        %v2757 = vlaneseq
        %v2758 = vand.u32 %v2757, 127
        %v2759 = vperm.slane %v2259, %v2758
        %v2760 = vadd.s32 %v2758, 4294967288
        %v2761 = vperm.slane %v2274, %v2760
        %vm2762 = vcmask 130112
        %v2763 = vsel %vm2762, %v2761, %v2759
        %v2764 = vadd.s32 %v2758, 4294967280
        %v2765 = vperm.slane %v2289, %v2764
        %vm2766 = vcmask 195712
        %v2767 = vsel %vm2766, %v2765, %v2763
        %v2768 = vadd.s32 %v2758, 4294967272
        %v2769 = vperm.slane %v2304, %v2768
        %vm2770 = vcmask 261312
        %v2771 = vsel %vm2770, %v2769, %v2767
        %v2772 = vperm.slane %v2319, %v2758
        %v2773 = vperm.slane %v2334, %v2760
        %v2774 = vsel %vm2762, %v2773, %v2772
        %v2775 = vperm.slane %v2349, %v2764
        %v2776 = vsel %vm2766, %v2775, %v2774
        %v2777 = vperm.slane %v2364, %v2768
        %v2778 = vsel %vm2770, %v2777, %v2776
        %v2779 = vperm.slane %v2379, %v2758
        %v2780 = vperm.slane %v2394, %v2760
        %v2781 = vsel %vm2762, %v2780, %v2779
        %v2782 = vperm.slane %v2409, %v2764
        %v2783 = vsel %vm2766, %v2782, %v2781
        %v2784 = vperm.slane %v2424, %v2768
        %v2785 = vsel %vm2770, %v2784, %v2783
        %v2786 = vperm.slane %v2439, %v2758
        %v2787 = vperm.slane %v2454, %v2760
        %v2788 = vsel %vm2762, %v2787, %v2786
        %v2789 = vperm.slane %v2469, %v2764
        %v2790 = vsel %vm2766, %v2789, %v2788
        %v2791 = vperm.slane %v2484, %v2768
        %v2792 = vsel %vm2770, %v2791, %v2790
        %v2793 = vperm.slane %v2499, %v2758
        %v2794 = vperm.slane %v2514, %v2760
        %v2795 = vsel %vm2762, %v2794, %v2793
        %v2796 = vperm.slane %v2529, %v2764
        %v2797 = vsel %vm2766, %v2796, %v2795
        %v2798 = vperm.slane %v2544, %v2768
        %v2799 = vsel %vm2770, %v2798, %v2797
        %v2800 = vperm.slane %v2559, %v2758
        %v2801 = vperm.slane %v2574, %v2760
        %v2802 = vsel %vm2762, %v2801, %v2800
        %v2803 = vperm.slane %v2589, %v2764
        %v2804 = vsel %vm2766, %v2803, %v2802
        %v2805 = vperm.slane %v2604, %v2768
        %v2806 = vsel %vm2770, %v2805, %v2804
        %v2807 = vperm.slane %v2619, %v2758
        %v2808 = vperm.slane %v2634, %v2760
        %v2809 = vsel %vm2762, %v2808, %v2807
        %v2810 = vperm.slane %v2649, %v2764
        %v2811 = vsel %vm2766, %v2810, %v2809
        %v2812 = vperm.slane %v2664, %v2768
        %v2813 = vsel %vm2770, %v2812, %v2811
        %v2814 = vperm.slane %v2679, %v2758
        %v2815 = vperm.slane %v2694, %v2760
        %v2816 = vsel %vm2762, %v2815, %v2814
        %v2817 = vperm.slane %v2709, %v2764
        %v2818 = vsel %vm2766, %v2817, %v2816
        %v2819 = vperm.slane %v2724, %v2768
        %v2820 = vsel %vm2770, %v2819, %v2818
        %vm2821 = vcmask 1041409
        %v2822 = vsel %vm2821, %v2778, %v2771
        %vm2823 = vcmask 1042434
        %v2824 = vsel %vm2823, %v2785, %v2822
        %vm2825 = vcmask 1043459
        %v2826 = vsel %vm2825, %v2792, %v2824
        %vm2827 = vcmask 1044484
        %v2828 = vsel %vm2827, %v2799, %v2826
        %vm2829 = vcmask 1045509
        %v2830 = vsel %vm2829, %v2806, %v2828
        %vm2831 = vcmask 1046534
        %v2832 = vsel %vm2831, %v2813, %v2830
        %vm2833 = vcmask 1047559
        %v2834 = vsel %vm2833, %v2820, %v2832
        %vm2836 = vcmask 261120
        %2837 = vst.msk [vmem:[%s495] sm:$0xff] %vm2836, %v2834
        %s2838 = sand.u32 %s319, 1
        %s2839 = scalar_lea.sflag [#allocation3], %s2838
        %s2840 = sand.u32 %s319, 1
        %s2841 = smul.addr %s2840, 8
        %s2842 = scalar_lea.vmem [#allocation2], %s2841
        // Predicated region
        $region65: #{tpu_custom_call.1} parent=63 // pred_check
          %p2843 = pneg %p329
        $region66: #{tpu_custom_call.1} parent=63 // pred_check_branch
          %2845 = sbr.rel (%p2843) target = $region68
        $region67: #{tpu_custom_call.1} parent=63 // pred_region
          %2847 = vsyncadd %s2839, 0
          %s2848 = sadd.s32 %s30, %s29
          %s2849 = smul.addr %s2848, 8
          %s2850 = scalar_lea.hbm %s11, %s2849
          %s2852 = sshll.u32 %s2842, 4
          %s2853 = int_to_ptr.vmem [resolvable:$true] %s2852
          %s2854 = sshll.u32 %s2850, 4
          %s2855 = int_to_ptr.hbm [resolvable:$true] %s2854
          %2857 = dma.vmem_to_hbm [thread:$0]  %s2853, 128, %s2855, %s2839
        $region68: #{tpu_custom_call.1} parent=63 // pred_fallthru
          _
      $region64: #{tpu_custom_call.1} parent=5 // pred_fallthru
        _
      %p2858 = scmp.le.s32.totalorder 2, %s20
      // Predicated region
      $region69: #{tpu_custom_call.1} parent=5 // pred_check
        %p2859 = pneg %p2858
      $region70: #{tpu_custom_call.1} parent=5 // pred_check_branch
        %2861 = sbr.rel (%p2859) target = $region72
      $region71: #{tpu_custom_call.1} parent=5 // pred_region
        %s2862 = ssub.s32 %s20, 2
        // Predicated region
        $region73: #{tpu_custom_call.1} parent=71 // pred_check
          %p2863 = pneg %p335
        $region74: #{tpu_custom_call.1} parent=71 // pred_check_branch
          %2865 = sbr.rel (%p2863) target = $region76
        $region75: #{tpu_custom_call.1} parent=71 // pred_region
          %s2866 = sand.u32 %s320, 1
          %s2867 = scalar_lea.sflag [#allocation3], %s2866
          %s2868 = sand.u32 %s320, 1
          %s2869 = smul.addr %s2868, 8
          %s2870 = scalar_lea.vmem [#allocation2], %s2869
          %2872 = dma.done %s2867, 128
        $region76: #{tpu_custom_call.1} parent=71 // pred_fallthru
          _
      $region72: #{tpu_custom_call.1} parent=5 // pred_fallthru
        _
    $region6: #{tpu_custom_call.1} parent=1 // loop_footer
      %s24 = sadd.s32 1, %s20
    $region7: #{tpu_custom_call.1} parent=1 // loop_footer_branch
      %19 = sbr.rel target = $region3
    $region8: #{tpu_custom_call.1} parent=1 // loop_exit
      _
    %2873 = vsyncpa [#allocation3], 1
    %s2874 = scalar_lea.sflag [#allocation3], 1
    %2875 = vsyncpa %s2874, 1

</llo_original>
